<compile_context>
chip_gen: v7x
topology: tpu7x:2x2x1
jax: 0.10.0
libtpu: 0.0.40
codegen_flags: <defaults>
</compile_context>

<pallas_src>
import functools

import jax
import jax.numpy as jnp
from jax import lax
from jax.experimental import pallas as pl
from jax.experimental.pallas import tpu as pltpu


def _round_up(x: int, m: int) -> int:
    return ((x + m - 1) // m) * m


def _rcb_kernel_single_k(a_ref, b_ref, scale_ref, bias_ref, o_ref):
    """One (TM, TN) output tile; the whole K reduction fits a single dot."""
    a = jnp.maximum(a_ref[...], 0)                                    # fused ReLU (VPU)
    acc = jnp.dot(a, b_ref[...], preferred_element_type=jnp.float32)  # MXU, f32 acc
    # Fused eval-mode BatchNorm epilogue: per-output-channel scale + bias.
    o_ref[...] = (acc * scale_ref[...] + bias_ref[...]).astype(o_ref.dtype)


def _rcb_kernel_tiled_k(a_ref, b_ref, scale_ref, bias_ref, o_ref, acc_ref):
    """One (TM, TN) output tile; grid axis 2 reduces over K blocks (large K)."""
    k = pl.program_id(2)

    @pl.when(k == 0)
    def _():
        acc_ref[...] = jnp.zeros_like(acc_ref)

    a = jnp.maximum(a_ref[...], 0)
    acc_ref[...] += jnp.dot(a, b_ref[...], preferred_element_type=jnp.float32)

    @pl.when(k == pl.num_programs(2) - 1)
    def _():
        o_ref[...] = (acc_ref[...] * scale_ref[...] + bias_ref[...]).astype(o_ref.dtype)


@functools.partial(jax.jit, static_argnames=("stride", "padding", "eps"))
def relu_conv_bn_forward(x, weight, gamma, beta, running_mean, running_var,
                         *, stride: int = 1, padding: int = 0, eps: float = 1e-5):
    """Pallas implementation of ReluConvBn.forward (eval-mode BN).

    x:      (N, C_in, H, W)        NCHW, like PyTorch
    weight: (C_out, C_in, kH, kW)  PyTorch Conv2d weight, no bias
    gamma, beta, running_mean, running_var: (C_out,)
    """
    n, c_in, h, w = x.shape
    c_out, c_in_w, kh, kw = weight.shape
    assert c_in == c_in_w, (c_in, c_in_w)

    h_out = (h + 2 * padding - kh) // stride + 1
    w_out = (w + 2 * padding - kw) // stride + 1
    m_dim = n * h_out * w_out
    k_dim = kh * kw * c_in
    out_dtype = x.dtype

    # ---- im2col glue (bf16 streamed operands) --------------------------------
    # ReLU commutes with the bf16 cast (sign-preserving rounding) and with the
    # zero spatial padding (relu(0) == 0), so it can stay fused in the kernel.
    x_bf = x.astype(jnp.bfloat16)
    x_nhwc = jnp.transpose(x_bf, (0, 2, 3, 1))
    x_pad = jnp.pad(x_nhwc, ((0, 0), (padding, padding), (padding, padding), (0, 0)))

    taps = []
    for i in range(kh):
        for j in range(kw):
            taps.append(
                lax.slice(
                    x_pad,
                    (0, i, j, 0),
                    (n, i + stride * (h_out - 1) + 1, j + stride * (w_out - 1) + 1, c_in),
                    (1, stride, stride, 1)))
    # (N, H_out, W_out, kh*kw, C_in) -> (M, K), K ordered (kh, kw, ci).
    lhs = jnp.stack(taps, axis=3).reshape(m_dim, k_dim)

    # Weight (C_out, C_in, kH, kW) -> (kH, kW, C_in, C_out) -> (K, C_out), bf16.
    rhs = jnp.transpose(weight, (2, 3, 1, 0)).reshape(k_dim, c_out).astype(jnp.bfloat16)

    # Eval-mode BatchNorm folded into per-channel scale / bias (f32).
    inv_std = (gamma / jnp.sqrt(running_var + eps)).astype(jnp.float32)
    bias = (beta - running_mean * inv_std).astype(jnp.float32)

    # ---- tile selection -------------------------------------------------------
    # K: pad only to the bf16 sublane multiple (16); single block unless huge.
    k_pad = _round_up(k_dim, 16)
    if k_pad <= 2048:
        tk, k_steps = k_pad, 1
    else:
        tk = 512
        k_pad = _round_up(k_dim, tk)
        k_steps = k_pad // tk

    # N: whole padded C_out when modest, so the RHS stays VMEM-resident and the
    # LHS streams exactly once; tile at 256 only for very wide layers.
    n_pad = _round_up(c_out, 128)
    if n_pad <= 512:
        tn = n_pad
    else:
        tn = 256
        n_pad = _round_up(c_out, tn)

    # M: as large as possible (up to 1024) under a ~10 MiB double-buffered VMEM
    # budget (fits v5e 16 MiB scoped default / v7x 64 MiB physical with room).
    def _vmem_bytes(tm_):
        return (2 * tm_ * tk * 2                     # LHS blocks (bf16, x2 buffers)
                + 2 * tk * tn * 2                    # RHS blocks (bf16, x2 buffers)
                + 2 * tm_ * tn * 4                   # output blocks (f32, x2 buffers)
                + (tm_ * tn * 4 if k_steps > 1 else 0)  # accumulator scratch
                + 4 * tn * 4)                        # scale / bias blocks

    tm = min(1024, _round_up(m_dim, 128))
    while tm > 128 and _vmem_bytes(tm) > 10 * 1024 * 1024:
        tm -= 128
    m_pad = _round_up(m_dim, tm)

    # ---- pad operands (zero rows/cols contribute nothing; sliced off below) --
    lhs_p = jnp.pad(lhs, ((0, m_pad - m_dim), (0, k_pad - k_dim)))
    rhs_p = jnp.pad(rhs, ((0, k_pad - k_dim), (0, n_pad - c_out)))
    scale_p = jnp.pad(inv_std, (0, n_pad - c_out)).reshape(1, n_pad)
    bias_p = jnp.pad(bias, (0, n_pad - c_out)).reshape(1, n_pad)

    cost = pl.CostEstimate(
        flops=2 * m_dim * k_dim * c_out,
        transcendentals=0,
        bytes_accessed=(lhs_p.size * 2 + rhs_p.size * 2
                        + m_pad * n_pad * jnp.dtype(out_dtype).itemsize))

    vmem_limit = 32 * 1024 * 1024

    if k_steps == 1:
        out_p = pl.pallas_call(
            _rcb_kernel_single_k,
            out_shape=jax.ShapeDtypeStruct((m_pad, n_pad), out_dtype),
            grid_spec=pltpu.PrefetchScalarGridSpec(
                num_scalar_prefetch=0,
                grid=(m_pad // tm, n_pad // tn),
                in_specs=[
                    pl.BlockSpec((tm, tk), lambda i, j: (i, 0)),   # im2col LHS
                    pl.BlockSpec((tk, tn), lambda i, j: (0, j)),   # weight RHS
                    pl.BlockSpec((1, tn), lambda i, j: (0, j)),    # BN scale
                    pl.BlockSpec((1, tn), lambda i, j: (0, j)),    # BN bias
                ],
                out_specs=pl.BlockSpec((tm, tn), lambda i, j: (i, j)),
            ),
            compiler_params=pltpu.CompilerParams(
                dimension_semantics=("parallel", "parallel"),
                vmem_limit_bytes=vmem_limit,
                allow_input_fusion=[True, False, False, False]),
            cost_estimate=cost,
        )(lhs_p, rhs_p, scale_p, bias_p)
    else:
        out_p = pl.pallas_call(
            _rcb_kernel_tiled_k,
            out_shape=jax.ShapeDtypeStruct((m_pad, n_pad), out_dtype),
            grid_spec=pltpu.PrefetchScalarGridSpec(
                num_scalar_prefetch=0,
                grid=(m_pad // tm, n_pad // tn, k_steps),
                in_specs=[
                    pl.BlockSpec((tm, tk), lambda i, j, k: (i, k)),
                    pl.BlockSpec((tk, tn), lambda i, j, k: (k, j)),
                    pl.BlockSpec((1, tn), lambda i, j, k: (0, j)),
                    pl.BlockSpec((1, tn), lambda i, j, k: (0, j)),
                ],
                out_specs=pl.BlockSpec((tm, tn), lambda i, j, k: (i, j)),
                scratch_shapes=[pltpu.VMEM((tm, tn), jnp.float32)],
            ),
            compiler_params=pltpu.CompilerParams(
                dimension_semantics=("parallel", "parallel", "arbitrary"),
                vmem_limit_bytes=vmem_limit,
                allow_input_fusion=[True, False, False, False]),
            cost_estimate=cost,
        )(lhs_p, rhs_p, scale_p, bias_p)

    # Strip padding, back to NCHW.
    out = out_p[:m_dim, :c_out].reshape(n, h_out, w_out, c_out)
    return jnp.transpose(out, (0, 3, 1, 2))


def _reference(x, weight, gamma, beta, mean, var, *, stride, padding, eps=1e-5):
    """Pure-JAX reference: relu -> conv2d -> eval-mode batchnorm (f32, HIGHEST)."""
    xr = jnp.maximum(x, 0.0)
    y = lax.conv_general_dilated(
        xr, weight,
        window_strides=(stride, stride),
        padding=((padding, padding), (padding, padding)),
        dimension_numbers=("NCHW", "OIHW", "NCHW"),
        precision=lax.Precision.HIGHEST)
    inv = gamma / jnp.sqrt(var + eps)
    return y * inv[None, :, None, None] + (beta - mean * inv)[None, :, None, None]


if __name__ == "__main__":
    key = jax.random.PRNGKey(0)
    k1, k2, k3, k4, k5, k6 = jax.random.split(key, 6)

    n, c_in, h, w = 2, 4, 16, 16
    c_out, ksize = 8, 3

    x = jax.random.normal(k1, (n, c_in, h, w), dtype=jnp.float32)
    weight = jax.random.normal(k2, (c_out, c_in, ksize, ksize), dtype=jnp.float32) * 0.1
    gamma = jax.random.uniform(k3, (c_out,), minval=0.5, maxval=1.5, dtype=jnp.float32)
    beta = jax.random.normal(k4, (c_out,), dtype=jnp.float32) * 0.1
    running_mean = jax.random.normal(k5, (c_out,), dtype=jnp.float32) * 0.1
    running_var = jax.random.uniform(k6, (c_out,), minval=0.5, maxval=1.5, dtype=jnp.float32)

    for stride, padding in ((1, 1), (2, 1)):
        y = relu_conv_bn_forward(x, weight, gamma, beta, running_mean, running_var,
                                 stride=stride, padding=padding)
        y = jax.block_until_ready(y)

        y_ref = _reference(x, weight, gamma, beta, running_mean, running_var,
                           stride=stride, padding=padding)
        h_out = (h + 2 * padding - ksize) // stride + 1
        assert y.shape == (n, c_out, h_out, h_out), y.shape
        max_err = float(jnp.max(jnp.abs(y - y_ref)))
        # bf16 streamed operands + f32 accumulation: expected error ~1e-2 max.
        assert bool(jnp.allclose(y, y_ref, atol=2e-2, rtol=2e-2)), max_err

    print("KERNEL_OK")
</pallas_src>

<mosaic_0001>
module attributes {stable_mosaic.version = 11 : i64} {
  func.func @_rcb_kernel_single_k(%arg0: i32, %arg1: i32, %arg2: memref<512x48xbf16, #tpu.memory_space<vmem>>, %arg3: memref<48x128xbf16, #tpu.memory_space<vmem>>, %arg4: memref<1x128xf32, #tpu.memory_space<vmem>>, %arg5: memref<1x128xf32, #tpu.memory_space<vmem>>, %arg6: memref<512x128xf32, #tpu.memory_space<vmem>>) attributes {dimension_semantics = [#tpu.dimension_semantics<parallel>, #tpu.dimension_semantics<parallel>], iteration_bounds = array<i64: 1, 1>, scalar_prefetch = 0 : i64, scratch_operands = 0 : i64, tpu.core_type = #tpu.core_type<tc>, window_params = [{transform_indices = @transform_0, window_bounds = array<i64: 512, 48>}, {transform_indices = @transform_1, window_bounds = array<i64: 48, 128>}, {transform_indices = @transform_2, window_bounds = array<i64: 1, 128>}, {transform_indices = @transform_3, window_bounds = array<i64: 1, 128>}, {transform_indices = @transform_4, window_bounds = array<i64: 512, 128>}]} {
    %c0 = arith.constant 0 : index
    %c0_0 = arith.constant 0 : index
    %0 = vector.load %arg2[%c0, %c0_0] : memref<512x48xbf16, #tpu.memory_space<vmem>>, vector<512x48xbf16>
    %cst = arith.constant 0.000000e+00 : bf16
    %1 = vector.broadcast %cst : bf16 to vector<512x48xbf16>
    %2 = arith.maximumf %0, %1 : vector<512x48xbf16>
    %c0_1 = arith.constant 0 : index
    %c0_2 = arith.constant 0 : index
    %3 = vector.load %arg3[%c0_1, %c0_2] : memref<48x128xbf16, #tpu.memory_space<vmem>>, vector<48x128xbf16>
    %cst_3 = arith.constant dense<0.000000e+00> : vector<512x128xf32>
    %4 = tpu.matmul %2, %3, %cst_3 {dimension_numbers = #tpu.dot_dimension_numbers<[1], [0], [0], [1], [0, 0, 1, 1], [], []>} : vector<512x48xbf16>, vector<48x128xbf16>, vector<512x128xf32> -> vector<512x128xf32>
    %c0_4 = arith.constant 0 : index
    %c0_5 = arith.constant 0 : index
    %5 = vector.load %arg4[%c0_4, %c0_5] : memref<1x128xf32, #tpu.memory_space<vmem>>, vector<1x128xf32>
    %6 = vector.broadcast %5 : vector<1x128xf32> to vector<512x128xf32>
    %7 = arith.mulf %4, %6 : vector<512x128xf32>
    %c0_6 = arith.constant 0 : index
    %c0_7 = arith.constant 0 : index
    %8 = vector.load %arg5[%c0_6, %c0_7] : memref<1x128xf32, #tpu.memory_space<vmem>>, vector<1x128xf32>
    %9 = vector.broadcast %8 : vector<1x128xf32> to vector<512x128xf32>
    %10 = arith.addf %7, %9 : vector<512x128xf32>
    %c0_8 = arith.constant 0 : index
    %c0_9 = arith.constant 0 : index
    %11 = vector.load %arg6[%c0_8, %c0_9] : memref<512x128xf32, #tpu.memory_space<vmem>>, vector<512x128xf32>
    tpu.vector_store %arg6[%c0_8, %c0_9], %10 {strides = array<i32>} : memref<512x128xf32, #tpu.memory_space<vmem>>, vector<512x128xf32>,
    return
  }
  func.func @transform_0(%arg0: i32, %arg1: i32) -> (i32, i32) {
    %c0_i32 = arith.constant 0 : i32
    %c0_i32_0 = arith.constant 0 : i32
    return %arg0, %c0_i32 : i32, i32
  }
  func.func @transform_1(%arg0: i32, %arg1: i32) -> (i32, i32) {
    %c0_i32 = arith.constant 0 : i32
    %c0_i32_0 = arith.constant 0 : i32
    return %c0_i32, %arg1 : i32, i32
  }
  func.func @transform_2(%arg0: i32, %arg1: i32) -> (i32, i32) {
    %c0_i32 = arith.constant 0 : i32
    %c0_i32_0 = arith.constant 0 : i32
    return %c0_i32, %arg1 : i32, i32
  }
  func.func @transform_3(%arg0: i32, %arg1: i32) -> (i32, i32) {
    %c0_i32 = arith.constant 0 : i32
    %c0_i32_0 = arith.constant 0 : i32
    return %c0_i32, %arg1 : i32, i32
  }
  func.func @transform_4(%arg0: i32, %arg1: i32) -> (i32, i32) {
    %c0_i32 = arith.constant 0 : i32
    return %arg0, %arg1 : i32, i32
  }
}

</mosaic_0001>

<llo_original>
// kernel: relu_conv_bn_forward.2
$region0: #{relu_conv_bn_forward.2}
  #allocation0 [shape = 'u32[]', space=smem, size = 0x4, offset = 0x4, fixed_abs, tag = 'smem constant byte address 0x4 - core index']
  #allocation1 [shape = 'u32[144,128]{1,0:T(1,128)}', space=vmem, size = 0x12000, scoped, tag = 'internal scratch']
  #allocation2 [shape = 'u32[2048]{0}', space=vmem, size = 0x2000, scoped, tag = 'scoped memory for relu_conv_bn_forward.2']
  #allocation3 [shape = 'u32[2048]{0}', space=vmem, size = 0x2000, scoped, tag = 'scoped memory for relu_conv_bn_forward.2']
  #allocation4 [shape = 'u32[2048]{0}', space=vmem, size = 0x2000, scoped, tag = 'scoped memory for relu_conv_bn_forward.2']
  #allocation5 [shape = 'u32[2048]{0}', space=vmem, size = 0x2000, scoped, tag = 'scoped memory for relu_conv_bn_forward.2']
  #allocation6 [shape = 'u32[2048]{0}', space=vmem, size = 0x2000, scoped, tag = 'scoped memory for relu_conv_bn_forward.2']
  %s0 = inlined_call_operand.vmem [shape: bf16[48,128], index: 0, kind: input, shape index: {}]
  %s1 = inlined_call_operand.vmem [shape: f32[1,128], index: 1, kind: input, shape index: {}]
  %s2 = inlined_call_operand.vmem [shape: f32[1,128], index: 2, kind: input, shape index: {}]
  %s3 = inlined_call_operand.vmem [shape: bf16[512,36], index: 3, kind: input, shape index: {}]
  %s4 = inlined_call_operand.<no memory space> [shape: bf16[], index: 4, kind: input, shape index: {}]
  %s5 = inlined_call_operand.vmem [shape: f32[512,128], index: 5, kind: output, shape index: {}]
  %s6 = sld [smem:[#allocation0]]
  $region26: #{relu_conv_bn_forward.2} parent=0
    _
  %s8 = ssub.s32 1, %s6
  %s9 = scalar_select 0, %s8, %s6
  %v10 = vstv %s4
  %v11 = vunpack.i.l.bf16 %v10
  %v13 = vunpack.i.h.bf16 %v10
  $region1: #{relu_conv_bn_forward.2} parent=0
    #allocation7 [shape = 'u8[131072]{0}', space=vmem, size = 0x20000, dematerialized = true, scoped, tag = 'FusionAdapter Buffer %fusion.1 = bf16[512,48]{1,0:T(8,128)(2,1)} fusion(%param_3.1, %param_4), kind=kLoop, calls=%fused_computation.1.clone, metadata={op_name="jit(relu_conv_bn_forward)/jit(_pad)/pad" stack_frame_id=18}']
    // Predicated region
    $region2: #{relu_conv_bn_forward.2} parent=1 // pred_check
      _
    $region3: #{relu_conv_bn_forward.2} parent=1 // pred_check_branch
      %16 = sbr.rel (0) target = $region5
    $region4: #{relu_conv_bn_forward.2} parent=1 // pred_region
      _
    $region5: #{relu_conv_bn_forward.2} parent=1 // pred_fallthru
      _
    // Predicated region
    $region6: #{relu_conv_bn_forward.2} parent=1 // pred_check
      _
    $region7: #{relu_conv_bn_forward.2} parent=1 // pred_check_branch
      %18 = sbr.rel (0) target = $region9
    $region8: #{relu_conv_bn_forward.2} parent=1 // pred_region
      _
    $region9: #{relu_conv_bn_forward.2} parent=1 // pred_fallthru
      _
    // Predicated region
    $region10: #{relu_conv_bn_forward.2} parent=1 // pred_check
      _
    $region11: #{relu_conv_bn_forward.2} parent=1 // pred_check_branch
      %20 = sbr.rel (0) target = $region13
    $region12: #{relu_conv_bn_forward.2} parent=1 // pred_region
      _
    $region13: #{relu_conv_bn_forward.2} parent=1 // pred_fallthru
      _
    // Predicated region
    $region14: #{relu_conv_bn_forward.2} parent=1 // pred_check
      _
    $region15: #{relu_conv_bn_forward.2} parent=1 // pred_check_branch
      %22 = sbr.rel (0) target = $region17
    $region16: #{relu_conv_bn_forward.2} parent=1 // pred_region
      _
    $region17: #{relu_conv_bn_forward.2} parent=1 // pred_fallthru
      _
    %s24 = sor.u32 255, 127
    %s25 = sand.u32 %s24, 85
    %s26 = sshrl.u32 %s25, 1
    %s27 = sor.u32 %s25, %s26
    %s28 = sand.u32 51, %s27
    %s29 = sshrl.u32 %s28, 2
    %s30 = sor.u32 %s28, %s29
    %s31 = sand.u32 15, %s30
    %v32 = vld [vmem:[%s3] sm:%s31]
    %v33 = vunpack.c.l.bf16 %v32
    %v34 = vunpack.c.h.bf16 %v32
    %v35 = vlaneseq
    %v36 = vand.u32 %v35, 127
    %vm38 = vcmp.lt.s32.totalorder %v36, 36
    %v39 = vsel %vm38, %v33, %v11
    %v40 = vpack.c.bf16 0.0, %v39
    %42 = vst [vmem:[#allocation7] sm:$0xf] %v40
    %s43 = scalar_lea.vmem %s3, 4
    %s45 = sor.u32 255, 127
    %s46 = sand.u32 %s45, 85
    %s47 = sshrl.u32 %s46, 1
    %s48 = sor.u32 %s46, %s47
    %s49 = sand.u32 51, %s48
    %s50 = sshrl.u32 %s49, 2
    %s51 = sor.u32 %s49, %s50
    %s52 = sand.u32 15, %s51
    %v53 = vld [vmem:[%s43] sm:%s52]
    %v54 = vunpack.c.l.bf16 %v53
    %v55 = vunpack.c.h.bf16 %v53
    %v56 = vlaneseq
    %v57 = vand.u32 %v56, 127
    %vm59 = vcmp.lt.s32.totalorder %v57, 36
    %v60 = vsel %vm59, %v54, %v11
    %s61 = scalar_lea.vmem [#allocation7], 4
    %v62 = vpack.c.bf16 0.0, %v60
    %64 = vst [vmem:[%s61] sm:$0xf] %v62
    %s65 = scalar_lea.vmem %s3, 8
    %s67 = sor.u32 255, 127
    %s68 = sand.u32 %s67, 85
    %s69 = sshrl.u32 %s68, 1
    %s70 = sor.u32 %s68, %s69
    %s71 = sand.u32 51, %s70
    %s72 = sshrl.u32 %s71, 2
    %s73 = sor.u32 %s71, %s72
    %s74 = sand.u32 15, %s73
    %v75 = vld [vmem:[%s65] sm:%s74]
    %v76 = vunpack.c.l.bf16 %v75
    %v77 = vunpack.c.h.bf16 %v75
    %v78 = vlaneseq
    %v79 = vand.u32 %v78, 127
    %vm81 = vcmp.lt.s32.totalorder %v79, 36
    %v82 = vsel %vm81, %v76, %v11
    %s83 = scalar_lea.vmem [#allocation7], 8
    %v84 = vpack.c.bf16 0.0, %v82
    %86 = vst [vmem:[%s83] sm:$0xf] %v84
    %s87 = scalar_lea.vmem %s3, 12
    %s89 = sor.u32 255, 127
    %s90 = sand.u32 %s89, 85
    %s91 = sshrl.u32 %s90, 1
    %s92 = sor.u32 %s90, %s91
    %s93 = sand.u32 51, %s92
    %s94 = sshrl.u32 %s93, 2
    %s95 = sor.u32 %s93, %s94
    %s96 = sand.u32 15, %s95
    %v97 = vld [vmem:[%s87] sm:%s96]
    %v98 = vunpack.c.l.bf16 %v97
    %v99 = vunpack.c.h.bf16 %v97
    %v100 = vlaneseq
    %v101 = vand.u32 %v100, 127
    %vm103 = vcmp.lt.s32.totalorder %v101, 36
    %v104 = vsel %vm103, %v98, %v11
    %s105 = scalar_lea.vmem [#allocation7], 12
    %v106 = vpack.c.bf16 0.0, %v104
    %108 = vst [vmem:[%s105] sm:$0xf] %v106
    %s109 = scalar_lea.vmem %s3, 16
    %s111 = sor.u32 255, 127
    %s112 = sand.u32 %s111, 85
    %s113 = sshrl.u32 %s112, 1
    %s114 = sor.u32 %s112, %s113
    %s115 = sand.u32 51, %s114
    %s116 = sshrl.u32 %s115, 2
    %s117 = sor.u32 %s115, %s116
    %s118 = sand.u32 15, %s117
    %v119 = vld [vmem:[%s109] sm:%s118]
    %v120 = vunpack.c.l.bf16 %v119
    %v121 = vunpack.c.h.bf16 %v119
    %v122 = vlaneseq
    %v123 = vand.u32 %v122, 127
    %vm125 = vcmp.lt.s32.totalorder %v123, 36
    %v126 = vsel %vm125, %v120, %v11
    %s127 = scalar_lea.vmem [#allocation7], 16
    %v128 = vpack.c.bf16 0.0, %v126
    %130 = vst [vmem:[%s127] sm:$0xf] %v128
    %s131 = scalar_lea.vmem %s3, 20
    %s133 = sor.u32 255, 127
    %s134 = sand.u32 %s133, 85
    %s135 = sshrl.u32 %s134, 1
    %s136 = sor.u32 %s134, %s135
    %s137 = sand.u32 51, %s136
    %s138 = sshrl.u32 %s137, 2
    %s139 = sor.u32 %s137, %s138
    %s140 = sand.u32 15, %s139
    %v141 = vld [vmem:[%s131] sm:%s140]
    %v142 = vunpack.c.l.bf16 %v141
    %v143 = vunpack.c.h.bf16 %v141
    %v144 = vlaneseq
    %v145 = vand.u32 %v144, 127
    %vm147 = vcmp.lt.s32.totalorder %v145, 36
    %v148 = vsel %vm147, %v142, %v11
    %s149 = scalar_lea.vmem [#allocation7], 20
    %v150 = vpack.c.bf16 0.0, %v148
    %152 = vst [vmem:[%s149] sm:$0xf] %v150
    %s153 = scalar_lea.vmem %s3, 24
    %s155 = sor.u32 255, 127
    %s156 = sand.u32 %s155, 85
    %s157 = sshrl.u32 %s156, 1
    %s158 = sor.u32 %s156, %s157
    %s159 = sand.u32 51, %s158
    %s160 = sshrl.u32 %s159, 2
    %s161 = sor.u32 %s159, %s160
    %s162 = sand.u32 15, %s161
    %v163 = vld [vmem:[%s153] sm:%s162]
    %v164 = vunpack.c.l.bf16 %v163
    %v165 = vunpack.c.h.bf16 %v163
    %v166 = vlaneseq
    %v167 = vand.u32 %v166, 127
    %vm169 = vcmp.lt.s32.totalorder %v167, 36
    %v170 = vsel %vm169, %v164, %v11
    %s171 = scalar_lea.vmem [#allocation7], 24
    %v172 = vpack.c.bf16 0.0, %v170
    %174 = vst [vmem:[%s171] sm:$0xf] %v172
    %s175 = scalar_lea.vmem %s3, 28
    %s177 = sor.u32 255, 127
    %s178 = sand.u32 %s177, 85
    %s179 = sshrl.u32 %s178, 1
    %s180 = sor.u32 %s178, %s179
    %s181 = sand.u32 51, %s180
    %s182 = sshrl.u32 %s181, 2
    %s183 = sor.u32 %s181, %s182
    %s184 = sand.u32 15, %s183
    %v185 = vld [vmem:[%s175] sm:%s184]
    %v186 = vunpack.c.l.bf16 %v185
    %v187 = vunpack.c.h.bf16 %v185
    %v188 = vlaneseq
    %v189 = vand.u32 %v188, 127
    %vm191 = vcmp.lt.s32.totalorder %v189, 36
    %v192 = vsel %vm191, %v186, %v11
    %s193 = scalar_lea.vmem [#allocation7], 28
    %v194 = vpack.c.bf16 0.0, %v192
    %196 = vst [vmem:[%s193] sm:$0xf] %v194
    %s197 = scalar_lea.vmem %s3, 32
    %s199 = sor.u32 255, 127
    %s200 = sand.u32 %s199, 85
    %s201 = sshrl.u32 %s200, 1
    %s202 = sor.u32 %s200, %s201
    %s203 = sand.u32 51, %s202
    %s204 = sshrl.u32 %s203, 2
    %s205 = sor.u32 %s203, %s204
    %s206 = sand.u32 15, %s205
    %v207 = vld [vmem:[%s197] sm:%s206]
    %v208 = vunpack.c.l.bf16 %v207
    %v209 = vunpack.c.h.bf16 %v207
    %v210 = vlaneseq
    %v211 = vand.u32 %v210, 127
    %vm213 = vcmp.lt.s32.totalorder %v211, 36
    %v214 = vsel %vm213, %v208, %v11
    %s215 = scalar_lea.vmem [#allocation7], 32
    %v216 = vpack.c.bf16 0.0, %v214
    %218 = vst [vmem:[%s215] sm:$0xf] %v216
    %s219 = scalar_lea.vmem %s3, 36
    %s221 = sor.u32 255, 127
    %s222 = sand.u32 %s221, 85
    %s223 = sshrl.u32 %s222, 1
    %s224 = sor.u32 %s222, %s223
    %s225 = sand.u32 51, %s224
    %s226 = sshrl.u32 %s225, 2
    %s227 = sor.u32 %s225, %s226
    %s228 = sand.u32 15, %s227
    %v229 = vld [vmem:[%s219] sm:%s228]
    %v230 = vunpack.c.l.bf16 %v229
    %v231 = vunpack.c.h.bf16 %v229
    %v232 = vlaneseq
    %v233 = vand.u32 %v232, 127
    %vm235 = vcmp.lt.s32.totalorder %v233, 36
    %v236 = vsel %vm235, %v230, %v11
    %s237 = scalar_lea.vmem [#allocation7], 36
    %v238 = vpack.c.bf16 0.0, %v236
    %240 = vst [vmem:[%s237] sm:$0xf] %v238
    %s241 = scalar_lea.vmem %s3, 40
    %s243 = sor.u32 255, 127
    %s244 = sand.u32 %s243, 85
    %s245 = sshrl.u32 %s244, 1
    %s246 = sor.u32 %s244, %s245
    %s247 = sand.u32 51, %s246
    %s248 = sshrl.u32 %s247, 2
    %s249 = sor.u32 %s247, %s248
    %s250 = sand.u32 15, %s249
    %v251 = vld [vmem:[%s241] sm:%s250]
    %v252 = vunpack.c.l.bf16 %v251
    %v253 = vunpack.c.h.bf16 %v251
    %v254 = vlaneseq
    %v255 = vand.u32 %v254, 127
    %vm257 = vcmp.lt.s32.totalorder %v255, 36
    %v258 = vsel %vm257, %v252, %v11
    %s259 = scalar_lea.vmem [#allocation7], 40
    %v260 = vpack.c.bf16 0.0, %v258
    %262 = vst [vmem:[%s259] sm:$0xf] %v260
    %s263 = scalar_lea.vmem %s3, 44
    %s265 = sor.u32 255, 127
    %s266 = sand.u32 %s265, 85
    %s267 = sshrl.u32 %s266, 1
    %s268 = sor.u32 %s266, %s267
    %s269 = sand.u32 51, %s268
    %s270 = sshrl.u32 %s269, 2
    %s271 = sor.u32 %s269, %s270
    %s272 = sand.u32 15, %s271
    %v273 = vld [vmem:[%s263] sm:%s272]
    %v274 = vunpack.c.l.bf16 %v273
    %v275 = vunpack.c.h.bf16 %v273
    %v276 = vlaneseq
    %v277 = vand.u32 %v276, 127
    %vm279 = vcmp.lt.s32.totalorder %v277, 36
    %v280 = vsel %vm279, %v274, %v11
    %s281 = scalar_lea.vmem [#allocation7], 44
    %v282 = vpack.c.bf16 0.0, %v280
    %284 = vst [vmem:[%s281] sm:$0xf] %v282
    %s285 = scalar_lea.vmem %s3, 48
    %s287 = sor.u32 255, 127
    %s288 = sand.u32 %s287, 85
    %s289 = sshrl.u32 %s288, 1
    %s290 = sor.u32 %s288, %s289
    %s291 = sand.u32 51, %s290
    %s292 = sshrl.u32 %s291, 2
    %s293 = sor.u32 %s291, %s292
    %s294 = sand.u32 15, %s293
    %v295 = vld [vmem:[%s285] sm:%s294]
    %v296 = vunpack.c.l.bf16 %v295
    %v297 = vunpack.c.h.bf16 %v295
    %v298 = vlaneseq
    %v299 = vand.u32 %v298, 127
    %vm301 = vcmp.lt.s32.totalorder %v299, 36
    %v302 = vsel %vm301, %v296, %v11
    %s303 = scalar_lea.vmem [#allocation7], 48
    %v304 = vpack.c.bf16 0.0, %v302
    %306 = vst [vmem:[%s303] sm:$0xf] %v304
    %s307 = scalar_lea.vmem %s3, 52
    %s309 = sor.u32 255, 127
    %s310 = sand.u32 %s309, 85
    %s311 = sshrl.u32 %s310, 1
    %s312 = sor.u32 %s310, %s311
    %s313 = sand.u32 51, %s312
    %s314 = sshrl.u32 %s313, 2
    %s315 = sor.u32 %s313, %s314
    %s316 = sand.u32 15, %s315
    %v317 = vld [vmem:[%s307] sm:%s316]
    %v318 = vunpack.c.l.bf16 %v317
    %v319 = vunpack.c.h.bf16 %v317
    %v320 = vlaneseq
    %v321 = vand.u32 %v320, 127
    %vm323 = vcmp.lt.s32.totalorder %v321, 36
    %v324 = vsel %vm323, %v318, %v11
    %s325 = scalar_lea.vmem [#allocation7], 52
    %v326 = vpack.c.bf16 0.0, %v324
    %328 = vst [vmem:[%s325] sm:$0xf] %v326
    %s329 = scalar_lea.vmem %s3, 56
    %s331 = sor.u32 255, 127
    %s332 = sand.u32 %s331, 85
    %s333 = sshrl.u32 %s332, 1
    %s334 = sor.u32 %s332, %s333
    %s335 = sand.u32 51, %s334
    %s336 = sshrl.u32 %s335, 2
    %s337 = sor.u32 %s335, %s336
    %s338 = sand.u32 15, %s337
    %v339 = vld [vmem:[%s329] sm:%s338]
    %v340 = vunpack.c.l.bf16 %v339
    %v341 = vunpack.c.h.bf16 %v339
    %v342 = vlaneseq
    %v343 = vand.u32 %v342, 127
    %vm345 = vcmp.lt.s32.totalorder %v343, 36
    %v346 = vsel %vm345, %v340, %v11
    %s347 = scalar_lea.vmem [#allocation7], 56
    %v348 = vpack.c.bf16 0.0, %v346
    %350 = vst [vmem:[%s347] sm:$0xf] %v348
    %s351 = scalar_lea.vmem %s3, 60
    %s353 = sor.u32 255, 127
    %s354 = sand.u32 %s353, 85
    %s355 = sshrl.u32 %s354, 1
    %s356 = sor.u32 %s354, %s355
    %s357 = sand.u32 51, %s356
    %s358 = sshrl.u32 %s357, 2
    %s359 = sor.u32 %s357, %s358
    %s360 = sand.u32 15, %s359
    %v361 = vld [vmem:[%s351] sm:%s360]
    %v362 = vunpack.c.l.bf16 %v361
    %v363 = vunpack.c.h.bf16 %v361
    %v364 = vlaneseq
    %v365 = vand.u32 %v364, 127
    %vm367 = vcmp.lt.s32.totalorder %v365, 36
    %v368 = vsel %vm367, %v362, %v11
    %s369 = scalar_lea.vmem [#allocation7], 60
    %v370 = vpack.c.bf16 0.0, %v368
    %372 = vst [vmem:[%s369] sm:$0xf] %v370
    %s373 = scalar_lea.vmem %s3, 64
    %s375 = sor.u32 255, 127
    %s376 = sand.u32 %s375, 85
    %s377 = sshrl.u32 %s376, 1
    %s378 = sor.u32 %s376, %s377
    %s379 = sand.u32 51, %s378
    %s380 = sshrl.u32 %s379, 2
    %s381 = sor.u32 %s379, %s380
    %s382 = sand.u32 15, %s381
    %v383 = vld [vmem:[%s373] sm:%s382]
    %v384 = vunpack.c.l.bf16 %v383
    %v385 = vunpack.c.h.bf16 %v383
    %v386 = vlaneseq
    %v387 = vand.u32 %v386, 127
    %vm389 = vcmp.lt.s32.totalorder %v387, 36
    %v390 = vsel %vm389, %v384, %v11
    %s391 = scalar_lea.vmem [#allocation7], 64
    %v392 = vpack.c.bf16 0.0, %v390
    %394 = vst [vmem:[%s391] sm:$0xf] %v392
    %s395 = scalar_lea.vmem %s3, 68
    %s397 = sor.u32 255, 127
    %s398 = sand.u32 %s397, 85
    %s399 = sshrl.u32 %s398, 1
    %s400 = sor.u32 %s398, %s399
    %s401 = sand.u32 51, %s400
    %s402 = sshrl.u32 %s401, 2
    %s403 = sor.u32 %s401, %s402
    %s404 = sand.u32 15, %s403
    %v405 = vld [vmem:[%s395] sm:%s404]
    %v406 = vunpack.c.l.bf16 %v405
    %v407 = vunpack.c.h.bf16 %v405
    %v408 = vlaneseq
    %v409 = vand.u32 %v408, 127
    %vm411 = vcmp.lt.s32.totalorder %v409, 36
    %v412 = vsel %vm411, %v406, %v11
    %s413 = scalar_lea.vmem [#allocation7], 68
    %v414 = vpack.c.bf16 0.0, %v412
    %416 = vst [vmem:[%s413] sm:$0xf] %v414
    %s417 = scalar_lea.vmem %s3, 72
    %s419 = sor.u32 255, 127
    %s420 = sand.u32 %s419, 85
    %s421 = sshrl.u32 %s420, 1
    %s422 = sor.u32 %s420, %s421
    %s423 = sand.u32 51, %s422
    %s424 = sshrl.u32 %s423, 2
    %s425 = sor.u32 %s423, %s424
    %s426 = sand.u32 15, %s425
    %v427 = vld [vmem:[%s417] sm:%s426]
    %v428 = vunpack.c.l.bf16 %v427
    %v429 = vunpack.c.h.bf16 %v427
    %v430 = vlaneseq
    %v431 = vand.u32 %v430, 127
    %vm433 = vcmp.lt.s32.totalorder %v431, 36
    %v434 = vsel %vm433, %v428, %v11
    %s435 = scalar_lea.vmem [#allocation7], 72
    %v436 = vpack.c.bf16 0.0, %v434
    %438 = vst [vmem:[%s435] sm:$0xf] %v436
    %s439 = scalar_lea.vmem %s3, 76
    %s441 = sor.u32 255, 127
    %s442 = sand.u32 %s441, 85
    %s443 = sshrl.u32 %s442, 1
    %s444 = sor.u32 %s442, %s443
    %s445 = sand.u32 51, %s444
    %s446 = sshrl.u32 %s445, 2
    %s447 = sor.u32 %s445, %s446
    %s448 = sand.u32 15, %s447
    %v449 = vld [vmem:[%s439] sm:%s448]
    %v450 = vunpack.c.l.bf16 %v449
    %v451 = vunpack.c.h.bf16 %v449
    %v452 = vlaneseq
    %v453 = vand.u32 %v452, 127
    %vm455 = vcmp.lt.s32.totalorder %v453, 36
    %v456 = vsel %vm455, %v450, %v11
    %s457 = scalar_lea.vmem [#allocation7], 76
    %v458 = vpack.c.bf16 0.0, %v456
    %460 = vst [vmem:[%s457] sm:$0xf] %v458
    %s461 = scalar_lea.vmem %s3, 80
    %s463 = sor.u32 255, 127
    %s464 = sand.u32 %s463, 85
    %s465 = sshrl.u32 %s464, 1
    %s466 = sor.u32 %s464, %s465
    %s467 = sand.u32 51, %s466
    %s468 = sshrl.u32 %s467, 2
    %s469 = sor.u32 %s467, %s468
    %s470 = sand.u32 15, %s469
    %v471 = vld [vmem:[%s461] sm:%s470]
    %v472 = vunpack.c.l.bf16 %v471
    %v473 = vunpack.c.h.bf16 %v471
    %v474 = vlaneseq
    %v475 = vand.u32 %v474, 127
    %vm477 = vcmp.lt.s32.totalorder %v475, 36
    %v478 = vsel %vm477, %v472, %v11
    %s479 = scalar_lea.vmem [#allocation7], 80
    %v480 = vpack.c.bf16 0.0, %v478
    %482 = vst [vmem:[%s479] sm:$0xf] %v480
    %s483 = scalar_lea.vmem %s3, 84
    %s485 = sor.u32 255, 127
    %s486 = sand.u32 %s485, 85
    %s487 = sshrl.u32 %s486, 1
    %s488 = sor.u32 %s486, %s487
    %s489 = sand.u32 51, %s488
    %s490 = sshrl.u32 %s489, 2
    %s491 = sor.u32 %s489, %s490
    %s492 = sand.u32 15, %s491
    %v493 = vld [vmem:[%s483] sm:%s492]
    %v494 = vunpack.c.l.bf16 %v493
    %v495 = vunpack.c.h.bf16 %v493
    %v496 = vlaneseq
    %v497 = vand.u32 %v496, 127
    %vm499 = vcmp.lt.s32.totalorder %v497, 36
    %v500 = vsel %vm499, %v494, %v11
    %s501 = scalar_lea.vmem [#allocation7], 84
    %v502 = vpack.c.bf16 0.0, %v500
    %504 = vst [vmem:[%s501] sm:$0xf] %v502
    %s505 = scalar_lea.vmem %s3, 88
    %s507 = sor.u32 255, 127
    %s508 = sand.u32 %s507, 85
    %s509 = sshrl.u32 %s508, 1
    %s510 = sor.u32 %s508, %s509
    %s511 = sand.u32 51, %s510
    %s512 = sshrl.u32 %s511, 2
    %s513 = sor.u32 %s511, %s512
    %s514 = sand.u32 15, %s513
    %v515 = vld [vmem:[%s505] sm:%s514]
    %v516 = vunpack.c.l.bf16 %v515
    %v517 = vunpack.c.h.bf16 %v515
    %v518 = vlaneseq
    %v519 = vand.u32 %v518, 127
    %vm521 = vcmp.lt.s32.totalorder %v519, 36
    %v522 = vsel %vm521, %v516, %v11
    %s523 = scalar_lea.vmem [#allocation7], 88
    %v524 = vpack.c.bf16 0.0, %v522
    %526 = vst [vmem:[%s523] sm:$0xf] %v524
    %s527 = scalar_lea.vmem %s3, 92
    %s529 = sor.u32 255, 127
    %s530 = sand.u32 %s529, 85
    %s531 = sshrl.u32 %s530, 1
    %s532 = sor.u32 %s530, %s531
    %s533 = sand.u32 51, %s532
    %s534 = sshrl.u32 %s533, 2
    %s535 = sor.u32 %s533, %s534
    %s536 = sand.u32 15, %s535
    %v537 = vld [vmem:[%s527] sm:%s536]
    %v538 = vunpack.c.l.bf16 %v537
    %v539 = vunpack.c.h.bf16 %v537
    %v540 = vlaneseq
    %v541 = vand.u32 %v540, 127
    %vm543 = vcmp.lt.s32.totalorder %v541, 36
    %v544 = vsel %vm543, %v538, %v11
    %s545 = scalar_lea.vmem [#allocation7], 92
    %v546 = vpack.c.bf16 0.0, %v544
    %548 = vst [vmem:[%s545] sm:$0xf] %v546
    %s549 = scalar_lea.vmem %s3, 96
    %s551 = sor.u32 255, 127
    %s552 = sand.u32 %s551, 85
    %s553 = sshrl.u32 %s552, 1
    %s554 = sor.u32 %s552, %s553
    %s555 = sand.u32 51, %s554
    %s556 = sshrl.u32 %s555, 2
    %s557 = sor.u32 %s555, %s556
    %s558 = sand.u32 15, %s557
    %v559 = vld [vmem:[%s549] sm:%s558]
    %v560 = vunpack.c.l.bf16 %v559
    %v561 = vunpack.c.h.bf16 %v559
    %v562 = vlaneseq
    %v563 = vand.u32 %v562, 127
    %vm565 = vcmp.lt.s32.totalorder %v563, 36
    %v566 = vsel %vm565, %v560, %v11
    %s567 = scalar_lea.vmem [#allocation7], 96
    %v568 = vpack.c.bf16 0.0, %v566
    %570 = vst [vmem:[%s567] sm:$0xf] %v568
    %s571 = scalar_lea.vmem %s3, 100
    %s573 = sor.u32 255, 127
    %s574 = sand.u32 %s573, 85
    %s575 = sshrl.u32 %s574, 1
    %s576 = sor.u32 %s574, %s575
    %s577 = sand.u32 51, %s576
    %s578 = sshrl.u32 %s577, 2
    %s579 = sor.u32 %s577, %s578
    %s580 = sand.u32 15, %s579
    %v581 = vld [vmem:[%s571] sm:%s580]
    %v582 = vunpack.c.l.bf16 %v581
    %v583 = vunpack.c.h.bf16 %v581
    %v584 = vlaneseq
    %v585 = vand.u32 %v584, 127
    %vm587 = vcmp.lt.s32.totalorder %v585, 36
    %v588 = vsel %vm587, %v582, %v11
    %s589 = scalar_lea.vmem [#allocation7], 100
    %v590 = vpack.c.bf16 0.0, %v588
    %592 = vst [vmem:[%s589] sm:$0xf] %v590
    %s593 = scalar_lea.vmem %s3, 104
    %s595 = sor.u32 255, 127
    %s596 = sand.u32 %s595, 85
    %s597 = sshrl.u32 %s596, 1
    %s598 = sor.u32 %s596, %s597
    %s599 = sand.u32 51, %s598
    %s600 = sshrl.u32 %s599, 2
    %s601 = sor.u32 %s599, %s600
    %s602 = sand.u32 15, %s601
    %v603 = vld [vmem:[%s593] sm:%s602]
    %v604 = vunpack.c.l.bf16 %v603
    %v605 = vunpack.c.h.bf16 %v603
    %v606 = vlaneseq
    %v607 = vand.u32 %v606, 127
    %vm609 = vcmp.lt.s32.totalorder %v607, 36
    %v610 = vsel %vm609, %v604, %v11
    %s611 = scalar_lea.vmem [#allocation7], 104
    %v612 = vpack.c.bf16 0.0, %v610
    %614 = vst [vmem:[%s611] sm:$0xf] %v612
    %s615 = scalar_lea.vmem %s3, 108
    %s617 = sor.u32 255, 127
    %s618 = sand.u32 %s617, 85
    %s619 = sshrl.u32 %s618, 1
    %s620 = sor.u32 %s618, %s619
    %s621 = sand.u32 51, %s620
    %s622 = sshrl.u32 %s621, 2
    %s623 = sor.u32 %s621, %s622
    %s624 = sand.u32 15, %s623
    %v625 = vld [vmem:[%s615] sm:%s624]
    %v626 = vunpack.c.l.bf16 %v625
    %v627 = vunpack.c.h.bf16 %v625
    %v628 = vlaneseq
    %v629 = vand.u32 %v628, 127
    %vm631 = vcmp.lt.s32.totalorder %v629, 36
    %v632 = vsel %vm631, %v626, %v11
    %s633 = scalar_lea.vmem [#allocation7], 108
    %v634 = vpack.c.bf16 0.0, %v632
    %636 = vst [vmem:[%s633] sm:$0xf] %v634
    %s637 = scalar_lea.vmem %s3, 112
    %s639 = sor.u32 255, 127
    %s640 = sand.u32 %s639, 85
    %s641 = sshrl.u32 %s640, 1
    %s642 = sor.u32 %s640, %s641
    %s643 = sand.u32 51, %s642
    %s644 = sshrl.u32 %s643, 2
    %s645 = sor.u32 %s643, %s644
    %s646 = sand.u32 15, %s645
    %v647 = vld [vmem:[%s637] sm:%s646]
    %v648 = vunpack.c.l.bf16 %v647
    %v649 = vunpack.c.h.bf16 %v647
    %v650 = vlaneseq
    %v651 = vand.u32 %v650, 127
    %vm653 = vcmp.lt.s32.totalorder %v651, 36
    %v654 = vsel %vm653, %v648, %v11
    %s655 = scalar_lea.vmem [#allocation7], 112
    %v656 = vpack.c.bf16 0.0, %v654
    %658 = vst [vmem:[%s655] sm:$0xf] %v656
    %s659 = scalar_lea.vmem %s3, 116
    %s661 = sor.u32 255, 127
    %s662 = sand.u32 %s661, 85
    %s663 = sshrl.u32 %s662, 1
    %s664 = sor.u32 %s662, %s663
    %s665 = sand.u32 51, %s664
    %s666 = sshrl.u32 %s665, 2
    %s667 = sor.u32 %s665, %s666
    %s668 = sand.u32 15, %s667
    %v669 = vld [vmem:[%s659] sm:%s668]
    %v670 = vunpack.c.l.bf16 %v669
    %v671 = vunpack.c.h.bf16 %v669
    %v672 = vlaneseq
    %v673 = vand.u32 %v672, 127
    %vm675 = vcmp.lt.s32.totalorder %v673, 36
    %v676 = vsel %vm675, %v670, %v11
    %s677 = scalar_lea.vmem [#allocation7], 116
    %v678 = vpack.c.bf16 0.0, %v676
    %680 = vst [vmem:[%s677] sm:$0xf] %v678
    %s681 = scalar_lea.vmem %s3, 120
    %s683 = sor.u32 255, 127
    %s684 = sand.u32 %s683, 85
    %s685 = sshrl.u32 %s684, 1
    %s686 = sor.u32 %s684, %s685
    %s687 = sand.u32 51, %s686
    %s688 = sshrl.u32 %s687, 2
    %s689 = sor.u32 %s687, %s688
    %s690 = sand.u32 15, %s689
    %v691 = vld [vmem:[%s681] sm:%s690]
    %v692 = vunpack.c.l.bf16 %v691
    %v693 = vunpack.c.h.bf16 %v691
    %v694 = vlaneseq
    %v695 = vand.u32 %v694, 127
    %vm697 = vcmp.lt.s32.totalorder %v695, 36
    %v698 = vsel %vm697, %v692, %v11
    %s699 = scalar_lea.vmem [#allocation7], 120
    %v700 = vpack.c.bf16 0.0, %v698
    %702 = vst [vmem:[%s699] sm:$0xf] %v700
    %s703 = scalar_lea.vmem %s3, 124
    %s705 = sor.u32 255, 127
    %s706 = sand.u32 %s705, 85
    %s707 = sshrl.u32 %s706, 1
    %s708 = sor.u32 %s706, %s707
    %s709 = sand.u32 51, %s708
    %s710 = sshrl.u32 %s709, 2
    %s711 = sor.u32 %s709, %s710
    %s712 = sand.u32 15, %s711
    %v713 = vld [vmem:[%s703] sm:%s712]
    %v714 = vunpack.c.l.bf16 %v713
    %v715 = vunpack.c.h.bf16 %v713
    %v716 = vlaneseq
    %v717 = vand.u32 %v716, 127
    %vm719 = vcmp.lt.s32.totalorder %v717, 36
    %v720 = vsel %vm719, %v714, %v11
    %s721 = scalar_lea.vmem [#allocation7], 124
    %v722 = vpack.c.bf16 0.0, %v720
    %724 = vst [vmem:[%s721] sm:$0xf] %v722
    %s725 = scalar_lea.vmem %s3, 128
    %s727 = sor.u32 255, 127
    %s728 = sand.u32 %s727, 85
    %s729 = sshrl.u32 %s728, 1
    %s730 = sor.u32 %s728, %s729
    %s731 = sand.u32 51, %s730
    %s732 = sshrl.u32 %s731, 2
    %s733 = sor.u32 %s731, %s732
    %s734 = sand.u32 15, %s733
    %v735 = vld [vmem:[%s725] sm:%s734]
    %v736 = vunpack.c.l.bf16 %v735
    %v737 = vunpack.c.h.bf16 %v735
    %v738 = vlaneseq
    %v739 = vand.u32 %v738, 127
    %vm741 = vcmp.lt.s32.totalorder %v739, 36
    %v742 = vsel %vm741, %v736, %v11
    %s743 = scalar_lea.vmem [#allocation7], 128
    %v744 = vpack.c.bf16 0.0, %v742
    %746 = vst [vmem:[%s743] sm:$0xf] %v744
    %s747 = scalar_lea.vmem %s3, 132
    %s749 = sor.u32 255, 127
    %s750 = sand.u32 %s749, 85
    %s751 = sshrl.u32 %s750, 1
    %s752 = sor.u32 %s750, %s751
    %s753 = sand.u32 51, %s752
    %s754 = sshrl.u32 %s753, 2
    %s755 = sor.u32 %s753, %s754
    %s756 = sand.u32 15, %s755
    %v757 = vld [vmem:[%s747] sm:%s756]
    %v758 = vunpack.c.l.bf16 %v757
    %v759 = vunpack.c.h.bf16 %v757
    %v760 = vlaneseq
    %v761 = vand.u32 %v760, 127
    %vm763 = vcmp.lt.s32.totalorder %v761, 36
    %v764 = vsel %vm763, %v758, %v11
    %s765 = scalar_lea.vmem [#allocation7], 132
    %v766 = vpack.c.bf16 0.0, %v764
    %768 = vst [vmem:[%s765] sm:$0xf] %v766
    %s769 = scalar_lea.vmem %s3, 136
    %s771 = sor.u32 255, 127
    %s772 = sand.u32 %s771, 85
    %s773 = sshrl.u32 %s772, 1
    %s774 = sor.u32 %s772, %s773
    %s775 = sand.u32 51, %s774
    %s776 = sshrl.u32 %s775, 2
    %s777 = sor.u32 %s775, %s776
    %s778 = sand.u32 15, %s777
    %v779 = vld [vmem:[%s769] sm:%s778]
    %v780 = vunpack.c.l.bf16 %v779
    %v781 = vunpack.c.h.bf16 %v779
    %v782 = vlaneseq
    %v783 = vand.u32 %v782, 127
    %vm785 = vcmp.lt.s32.totalorder %v783, 36
    %v786 = vsel %vm785, %v780, %v11
    %s787 = scalar_lea.vmem [#allocation7], 136
    %v788 = vpack.c.bf16 0.0, %v786
    %790 = vst [vmem:[%s787] sm:$0xf] %v788
    %s791 = scalar_lea.vmem %s3, 140
    %s793 = sor.u32 255, 127
    %s794 = sand.u32 %s793, 85
    %s795 = sshrl.u32 %s794, 1
    %s796 = sor.u32 %s794, %s795
    %s797 = sand.u32 51, %s796
    %s798 = sshrl.u32 %s797, 2
    %s799 = sor.u32 %s797, %s798
    %s800 = sand.u32 15, %s799
    %v801 = vld [vmem:[%s791] sm:%s800]
    %v802 = vunpack.c.l.bf16 %v801
    %v803 = vunpack.c.h.bf16 %v801
    %v804 = vlaneseq
    %v805 = vand.u32 %v804, 127
    %vm807 = vcmp.lt.s32.totalorder %v805, 36
    %v808 = vsel %vm807, %v802, %v11
    %s809 = scalar_lea.vmem [#allocation7], 140
    %v810 = vpack.c.bf16 0.0, %v808
    %812 = vst [vmem:[%s809] sm:$0xf] %v810
    %s813 = scalar_lea.vmem %s3, 144
    %s815 = sor.u32 255, 127
    %s816 = sand.u32 %s815, 85
    %s817 = sshrl.u32 %s816, 1
    %s818 = sor.u32 %s816, %s817
    %s819 = sand.u32 51, %s818
    %s820 = sshrl.u32 %s819, 2
    %s821 = sor.u32 %s819, %s820
    %s822 = sand.u32 15, %s821
    %v823 = vld [vmem:[%s813] sm:%s822]
    %v824 = vunpack.c.l.bf16 %v823
    %v825 = vunpack.c.h.bf16 %v823
    %v826 = vlaneseq
    %v827 = vand.u32 %v826, 127
    %vm829 = vcmp.lt.s32.totalorder %v827, 36
    %v830 = vsel %vm829, %v824, %v11
    %s831 = scalar_lea.vmem [#allocation7], 144
    %v832 = vpack.c.bf16 0.0, %v830
    %834 = vst [vmem:[%s831] sm:$0xf] %v832
    %s835 = scalar_lea.vmem %s3, 148
    %s837 = sor.u32 255, 127
    %s838 = sand.u32 %s837, 85
    %s839 = sshrl.u32 %s838, 1
    %s840 = sor.u32 %s838, %s839
    %s841 = sand.u32 51, %s840
    %s842 = sshrl.u32 %s841, 2
    %s843 = sor.u32 %s841, %s842
    %s844 = sand.u32 15, %s843
    %v845 = vld [vmem:[%s835] sm:%s844]
    %v846 = vunpack.c.l.bf16 %v845
    %v847 = vunpack.c.h.bf16 %v845
    %v848 = vlaneseq
    %v849 = vand.u32 %v848, 127
    %vm851 = vcmp.lt.s32.totalorder %v849, 36
    %v852 = vsel %vm851, %v846, %v11
    %s853 = scalar_lea.vmem [#allocation7], 148
    %v854 = vpack.c.bf16 0.0, %v852
    %856 = vst [vmem:[%s853] sm:$0xf] %v854
    %s857 = scalar_lea.vmem %s3, 152
    %s859 = sor.u32 255, 127
    %s860 = sand.u32 %s859, 85
    %s861 = sshrl.u32 %s860, 1
    %s862 = sor.u32 %s860, %s861
    %s863 = sand.u32 51, %s862
    %s864 = sshrl.u32 %s863, 2
    %s865 = sor.u32 %s863, %s864
    %s866 = sand.u32 15, %s865
    %v867 = vld [vmem:[%s857] sm:%s866]
    %v868 = vunpack.c.l.bf16 %v867
    %v869 = vunpack.c.h.bf16 %v867
    %v870 = vlaneseq
    %v871 = vand.u32 %v870, 127
    %vm873 = vcmp.lt.s32.totalorder %v871, 36
    %v874 = vsel %vm873, %v868, %v11
    %s875 = scalar_lea.vmem [#allocation7], 152
    %v876 = vpack.c.bf16 0.0, %v874
    %878 = vst [vmem:[%s875] sm:$0xf] %v876
    %s879 = scalar_lea.vmem %s3, 156
    %s881 = sor.u32 255, 127
    %s882 = sand.u32 %s881, 85
    %s883 = sshrl.u32 %s882, 1
    %s884 = sor.u32 %s882, %s883
    %s885 = sand.u32 51, %s884
    %s886 = sshrl.u32 %s885, 2
    %s887 = sor.u32 %s885, %s886
    %s888 = sand.u32 15, %s887
    %v889 = vld [vmem:[%s879] sm:%s888]
    %v890 = vunpack.c.l.bf16 %v889
    %v891 = vunpack.c.h.bf16 %v889
    %v892 = vlaneseq
    %v893 = vand.u32 %v892, 127
    %vm895 = vcmp.lt.s32.totalorder %v893, 36
    %v896 = vsel %vm895, %v890, %v11
    %s897 = scalar_lea.vmem [#allocation7], 156
    %v898 = vpack.c.bf16 0.0, %v896
    %900 = vst [vmem:[%s897] sm:$0xf] %v898
    %s901 = scalar_lea.vmem %s3, 160
    %s903 = sor.u32 255, 127
    %s904 = sand.u32 %s903, 85
    %s905 = sshrl.u32 %s904, 1
    %s906 = sor.u32 %s904, %s905
    %s907 = sand.u32 51, %s906
    %s908 = sshrl.u32 %s907, 2
    %s909 = sor.u32 %s907, %s908
    %s910 = sand.u32 15, %s909
    %v911 = vld [vmem:[%s901] sm:%s910]
    %v912 = vunpack.c.l.bf16 %v911
    %v913 = vunpack.c.h.bf16 %v911
    %v914 = vlaneseq
    %v915 = vand.u32 %v914, 127
    %vm917 = vcmp.lt.s32.totalorder %v915, 36
    %v918 = vsel %vm917, %v912, %v11
    %s919 = scalar_lea.vmem [#allocation7], 160
    %v920 = vpack.c.bf16 0.0, %v918
    %922 = vst [vmem:[%s919] sm:$0xf] %v920
    %s923 = scalar_lea.vmem %s3, 164
    %s925 = sor.u32 255, 127
    %s926 = sand.u32 %s925, 85
    %s927 = sshrl.u32 %s926, 1
    %s928 = sor.u32 %s926, %s927
    %s929 = sand.u32 51, %s928
    %s930 = sshrl.u32 %s929, 2
    %s931 = sor.u32 %s929, %s930
    %s932 = sand.u32 15, %s931
    %v933 = vld [vmem:[%s923] sm:%s932]
    %v934 = vunpack.c.l.bf16 %v933
    %v935 = vunpack.c.h.bf16 %v933
    %v936 = vlaneseq
    %v937 = vand.u32 %v936, 127
    %vm939 = vcmp.lt.s32.totalorder %v937, 36
    %v940 = vsel %vm939, %v934, %v11
    %s941 = scalar_lea.vmem [#allocation7], 164
    %v942 = vpack.c.bf16 0.0, %v940
    %944 = vst [vmem:[%s941] sm:$0xf] %v942
    %s945 = scalar_lea.vmem %s3, 168
    %s947 = sor.u32 255, 127
    %s948 = sand.u32 %s947, 85
    %s949 = sshrl.u32 %s948, 1
    %s950 = sor.u32 %s948, %s949
    %s951 = sand.u32 51, %s950
    %s952 = sshrl.u32 %s951, 2
    %s953 = sor.u32 %s951, %s952
    %s954 = sand.u32 15, %s953
    %v955 = vld [vmem:[%s945] sm:%s954]
    %v956 = vunpack.c.l.bf16 %v955
    %v957 = vunpack.c.h.bf16 %v955
    %v958 = vlaneseq
    %v959 = vand.u32 %v958, 127
    %vm961 = vcmp.lt.s32.totalorder %v959, 36
    %v962 = vsel %vm961, %v956, %v11
    %s963 = scalar_lea.vmem [#allocation7], 168
    %v964 = vpack.c.bf16 0.0, %v962
    %966 = vst [vmem:[%s963] sm:$0xf] %v964
    %s967 = scalar_lea.vmem %s3, 172
    %s969 = sor.u32 255, 127
    %s970 = sand.u32 %s969, 85
    %s971 = sshrl.u32 %s970, 1
    %s972 = sor.u32 %s970, %s971
    %s973 = sand.u32 51, %s972
    %s974 = sshrl.u32 %s973, 2
    %s975 = sor.u32 %s973, %s974
    %s976 = sand.u32 15, %s975
    %v977 = vld [vmem:[%s967] sm:%s976]
    %v978 = vunpack.c.l.bf16 %v977
    %v979 = vunpack.c.h.bf16 %v977
    %v980 = vlaneseq
    %v981 = vand.u32 %v980, 127
    %vm983 = vcmp.lt.s32.totalorder %v981, 36
    %v984 = vsel %vm983, %v978, %v11
    %s985 = scalar_lea.vmem [#allocation7], 172
    %v986 = vpack.c.bf16 0.0, %v984
    %988 = vst [vmem:[%s985] sm:$0xf] %v986
    %s989 = scalar_lea.vmem %s3, 176
    %s991 = sor.u32 255, 127
    %s992 = sand.u32 %s991, 85
    %s993 = sshrl.u32 %s992, 1
    %s994 = sor.u32 %s992, %s993
    %s995 = sand.u32 51, %s994
    %s996 = sshrl.u32 %s995, 2
    %s997 = sor.u32 %s995, %s996
    %s998 = sand.u32 15, %s997
    %v999 = vld [vmem:[%s989] sm:%s998]
    %v1000 = vunpack.c.l.bf16 %v999
    %v1001 = vunpack.c.h.bf16 %v999
    %v1002 = vlaneseq
    %v1003 = vand.u32 %v1002, 127
    %vm1005 = vcmp.lt.s32.totalorder %v1003, 36
    %v1006 = vsel %vm1005, %v1000, %v11
    %s1007 = scalar_lea.vmem [#allocation7], 176
    %v1008 = vpack.c.bf16 0.0, %v1006
    %1010 = vst [vmem:[%s1007] sm:$0xf] %v1008
    %s1011 = scalar_lea.vmem %s3, 180
    %s1013 = sor.u32 255, 127
    %s1014 = sand.u32 %s1013, 85
    %s1015 = sshrl.u32 %s1014, 1
    %s1016 = sor.u32 %s1014, %s1015
    %s1017 = sand.u32 51, %s1016
    %s1018 = sshrl.u32 %s1017, 2
    %s1019 = sor.u32 %s1017, %s1018
    %s1020 = sand.u32 15, %s1019
    %v1021 = vld [vmem:[%s1011] sm:%s1020]
    %v1022 = vunpack.c.l.bf16 %v1021
    %v1023 = vunpack.c.h.bf16 %v1021
    %v1024 = vlaneseq
    %v1025 = vand.u32 %v1024, 127
    %vm1027 = vcmp.lt.s32.totalorder %v1025, 36
    %v1028 = vsel %vm1027, %v1022, %v11
    %s1029 = scalar_lea.vmem [#allocation7], 180
    %v1030 = vpack.c.bf16 0.0, %v1028
    %1032 = vst [vmem:[%s1029] sm:$0xf] %v1030
    %s1033 = scalar_lea.vmem %s3, 184
    %s1035 = sor.u32 255, 127
    %s1036 = sand.u32 %s1035, 85
    %s1037 = sshrl.u32 %s1036, 1
    %s1038 = sor.u32 %s1036, %s1037
    %s1039 = sand.u32 51, %s1038
    %s1040 = sshrl.u32 %s1039, 2
    %s1041 = sor.u32 %s1039, %s1040
    %s1042 = sand.u32 15, %s1041
    %v1043 = vld [vmem:[%s1033] sm:%s1042]
    %v1044 = vunpack.c.l.bf16 %v1043
    %v1045 = vunpack.c.h.bf16 %v1043
    %v1046 = vlaneseq
    %v1047 = vand.u32 %v1046, 127
    %vm1049 = vcmp.lt.s32.totalorder %v1047, 36
    %v1050 = vsel %vm1049, %v1044, %v11
    %s1051 = scalar_lea.vmem [#allocation7], 184
    %v1052 = vpack.c.bf16 0.0, %v1050
    %1054 = vst [vmem:[%s1051] sm:$0xf] %v1052
    %s1055 = scalar_lea.vmem %s3, 188
    %s1057 = sor.u32 255, 127
    %s1058 = sand.u32 %s1057, 85
    %s1059 = sshrl.u32 %s1058, 1
    %s1060 = sor.u32 %s1058, %s1059
    %s1061 = sand.u32 51, %s1060
    %s1062 = sshrl.u32 %s1061, 2
    %s1063 = sor.u32 %s1061, %s1062
    %s1064 = sand.u32 15, %s1063
    %v1065 = vld [vmem:[%s1055] sm:%s1064]
    %v1066 = vunpack.c.l.bf16 %v1065
    %v1067 = vunpack.c.h.bf16 %v1065
    %v1068 = vlaneseq
    %v1069 = vand.u32 %v1068, 127
    %vm1071 = vcmp.lt.s32.totalorder %v1069, 36
    %v1072 = vsel %vm1071, %v1066, %v11
    %s1073 = scalar_lea.vmem [#allocation7], 188
    %v1074 = vpack.c.bf16 0.0, %v1072
    %1076 = vst [vmem:[%s1073] sm:$0xf] %v1074
    %s1077 = scalar_lea.vmem %s3, 192
    %s1079 = sor.u32 255, 127
    %s1080 = sand.u32 %s1079, 85
    %s1081 = sshrl.u32 %s1080, 1
    %s1082 = sor.u32 %s1080, %s1081
    %s1083 = sand.u32 51, %s1082
    %s1084 = sshrl.u32 %s1083, 2
    %s1085 = sor.u32 %s1083, %s1084
    %s1086 = sand.u32 15, %s1085
    %v1087 = vld [vmem:[%s1077] sm:%s1086]
    %v1088 = vunpack.c.l.bf16 %v1087
    %v1089 = vunpack.c.h.bf16 %v1087
    %v1090 = vlaneseq
    %v1091 = vand.u32 %v1090, 127
    %vm1093 = vcmp.lt.s32.totalorder %v1091, 36
    %v1094 = vsel %vm1093, %v1088, %v11
    %s1095 = scalar_lea.vmem [#allocation7], 192
    %v1096 = vpack.c.bf16 0.0, %v1094
    %1098 = vst [vmem:[%s1095] sm:$0xf] %v1096
    %s1099 = scalar_lea.vmem %s3, 196
    %s1101 = sor.u32 255, 127
    %s1102 = sand.u32 %s1101, 85
    %s1103 = sshrl.u32 %s1102, 1
    %s1104 = sor.u32 %s1102, %s1103
    %s1105 = sand.u32 51, %s1104
    %s1106 = sshrl.u32 %s1105, 2
    %s1107 = sor.u32 %s1105, %s1106
    %s1108 = sand.u32 15, %s1107
    %v1109 = vld [vmem:[%s1099] sm:%s1108]
    %v1110 = vunpack.c.l.bf16 %v1109
    %v1111 = vunpack.c.h.bf16 %v1109
    %v1112 = vlaneseq
    %v1113 = vand.u32 %v1112, 127
    %vm1115 = vcmp.lt.s32.totalorder %v1113, 36
    %v1116 = vsel %vm1115, %v1110, %v11
    %s1117 = scalar_lea.vmem [#allocation7], 196
    %v1118 = vpack.c.bf16 0.0, %v1116
    %1120 = vst [vmem:[%s1117] sm:$0xf] %v1118
    %s1121 = scalar_lea.vmem %s3, 200
    %s1123 = sor.u32 255, 127
    %s1124 = sand.u32 %s1123, 85
    %s1125 = sshrl.u32 %s1124, 1
    %s1126 = sor.u32 %s1124, %s1125
    %s1127 = sand.u32 51, %s1126
    %s1128 = sshrl.u32 %s1127, 2
    %s1129 = sor.u32 %s1127, %s1128
    %s1130 = sand.u32 15, %s1129
    %v1131 = vld [vmem:[%s1121] sm:%s1130]
    %v1132 = vunpack.c.l.bf16 %v1131
    %v1133 = vunpack.c.h.bf16 %v1131
    %v1134 = vlaneseq
    %v1135 = vand.u32 %v1134, 127
    %vm1137 = vcmp.lt.s32.totalorder %v1135, 36
    %v1138 = vsel %vm1137, %v1132, %v11
    %s1139 = scalar_lea.vmem [#allocation7], 200
    %v1140 = vpack.c.bf16 0.0, %v1138
    %1142 = vst [vmem:[%s1139] sm:$0xf] %v1140
    %s1143 = scalar_lea.vmem %s3, 204
    %s1145 = sor.u32 255, 127
    %s1146 = sand.u32 %s1145, 85
    %s1147 = sshrl.u32 %s1146, 1
    %s1148 = sor.u32 %s1146, %s1147
    %s1149 = sand.u32 51, %s1148
    %s1150 = sshrl.u32 %s1149, 2
    %s1151 = sor.u32 %s1149, %s1150
    %s1152 = sand.u32 15, %s1151
    %v1153 = vld [vmem:[%s1143] sm:%s1152]
    %v1154 = vunpack.c.l.bf16 %v1153
    %v1155 = vunpack.c.h.bf16 %v1153
    %v1156 = vlaneseq
    %v1157 = vand.u32 %v1156, 127
    %vm1159 = vcmp.lt.s32.totalorder %v1157, 36
    %v1160 = vsel %vm1159, %v1154, %v11
    %s1161 = scalar_lea.vmem [#allocation7], 204
    %v1162 = vpack.c.bf16 0.0, %v1160
    %1164 = vst [vmem:[%s1161] sm:$0xf] %v1162
    %s1165 = scalar_lea.vmem %s3, 208
    %s1167 = sor.u32 255, 127
    %s1168 = sand.u32 %s1167, 85
    %s1169 = sshrl.u32 %s1168, 1
    %s1170 = sor.u32 %s1168, %s1169
    %s1171 = sand.u32 51, %s1170
    %s1172 = sshrl.u32 %s1171, 2
    %s1173 = sor.u32 %s1171, %s1172
    %s1174 = sand.u32 15, %s1173
    %v1175 = vld [vmem:[%s1165] sm:%s1174]
    %v1176 = vunpack.c.l.bf16 %v1175
    %v1177 = vunpack.c.h.bf16 %v1175
    %v1178 = vlaneseq
    %v1179 = vand.u32 %v1178, 127
    %vm1181 = vcmp.lt.s32.totalorder %v1179, 36
    %v1182 = vsel %vm1181, %v1176, %v11
    %s1183 = scalar_lea.vmem [#allocation7], 208
    %v1184 = vpack.c.bf16 0.0, %v1182
    %1186 = vst [vmem:[%s1183] sm:$0xf] %v1184
    %s1187 = scalar_lea.vmem %s3, 212
    %s1189 = sor.u32 255, 127
    %s1190 = sand.u32 %s1189, 85
    %s1191 = sshrl.u32 %s1190, 1
    %s1192 = sor.u32 %s1190, %s1191
    %s1193 = sand.u32 51, %s1192
    %s1194 = sshrl.u32 %s1193, 2
    %s1195 = sor.u32 %s1193, %s1194
    %s1196 = sand.u32 15, %s1195
    %v1197 = vld [vmem:[%s1187] sm:%s1196]
    %v1198 = vunpack.c.l.bf16 %v1197
    %v1199 = vunpack.c.h.bf16 %v1197
    %v1200 = vlaneseq
    %v1201 = vand.u32 %v1200, 127
    %vm1203 = vcmp.lt.s32.totalorder %v1201, 36
    %v1204 = vsel %vm1203, %v1198, %v11
    %s1205 = scalar_lea.vmem [#allocation7], 212
    %v1206 = vpack.c.bf16 0.0, %v1204
    %1208 = vst [vmem:[%s1205] sm:$0xf] %v1206
    %s1209 = scalar_lea.vmem %s3, 216
    %s1211 = sor.u32 255, 127
    %s1212 = sand.u32 %s1211, 85
    %s1213 = sshrl.u32 %s1212, 1
    %s1214 = sor.u32 %s1212, %s1213
    %s1215 = sand.u32 51, %s1214
    %s1216 = sshrl.u32 %s1215, 2
    %s1217 = sor.u32 %s1215, %s1216
    %s1218 = sand.u32 15, %s1217
    %v1219 = vld [vmem:[%s1209] sm:%s1218]
    %v1220 = vunpack.c.l.bf16 %v1219
    %v1221 = vunpack.c.h.bf16 %v1219
    %v1222 = vlaneseq
    %v1223 = vand.u32 %v1222, 127
    %vm1225 = vcmp.lt.s32.totalorder %v1223, 36
    %v1226 = vsel %vm1225, %v1220, %v11
    %s1227 = scalar_lea.vmem [#allocation7], 216
    %v1228 = vpack.c.bf16 0.0, %v1226
    %1230 = vst [vmem:[%s1227] sm:$0xf] %v1228
    %s1231 = scalar_lea.vmem %s3, 220
    %s1233 = sor.u32 255, 127
    %s1234 = sand.u32 %s1233, 85
    %s1235 = sshrl.u32 %s1234, 1
    %s1236 = sor.u32 %s1234, %s1235
    %s1237 = sand.u32 51, %s1236
    %s1238 = sshrl.u32 %s1237, 2
    %s1239 = sor.u32 %s1237, %s1238
    %s1240 = sand.u32 15, %s1239
    %v1241 = vld [vmem:[%s1231] sm:%s1240]
    %v1242 = vunpack.c.l.bf16 %v1241
    %v1243 = vunpack.c.h.bf16 %v1241
    %v1244 = vlaneseq
    %v1245 = vand.u32 %v1244, 127
    %vm1247 = vcmp.lt.s32.totalorder %v1245, 36
    %v1248 = vsel %vm1247, %v1242, %v11
    %s1249 = scalar_lea.vmem [#allocation7], 220
    %v1250 = vpack.c.bf16 0.0, %v1248
    %1252 = vst [vmem:[%s1249] sm:$0xf] %v1250
    %s1253 = scalar_lea.vmem %s3, 224
    %s1255 = sor.u32 255, 127
    %s1256 = sand.u32 %s1255, 85
    %s1257 = sshrl.u32 %s1256, 1
    %s1258 = sor.u32 %s1256, %s1257
    %s1259 = sand.u32 51, %s1258
    %s1260 = sshrl.u32 %s1259, 2
    %s1261 = sor.u32 %s1259, %s1260
    %s1262 = sand.u32 15, %s1261
    %v1263 = vld [vmem:[%s1253] sm:%s1262]
    %v1264 = vunpack.c.l.bf16 %v1263
    %v1265 = vunpack.c.h.bf16 %v1263
    %v1266 = vlaneseq
    %v1267 = vand.u32 %v1266, 127
    %vm1269 = vcmp.lt.s32.totalorder %v1267, 36
    %v1270 = vsel %vm1269, %v1264, %v11
    %s1271 = scalar_lea.vmem [#allocation7], 224
    %v1272 = vpack.c.bf16 0.0, %v1270
    %1274 = vst [vmem:[%s1271] sm:$0xf] %v1272
    %s1275 = scalar_lea.vmem %s3, 228
    %s1277 = sor.u32 255, 127
    %s1278 = sand.u32 %s1277, 85
    %s1279 = sshrl.u32 %s1278, 1
    %s1280 = sor.u32 %s1278, %s1279
    %s1281 = sand.u32 51, %s1280
    %s1282 = sshrl.u32 %s1281, 2
    %s1283 = sor.u32 %s1281, %s1282
    %s1284 = sand.u32 15, %s1283
    %v1285 = vld [vmem:[%s1275] sm:%s1284]
    %v1286 = vunpack.c.l.bf16 %v1285
    %v1287 = vunpack.c.h.bf16 %v1285
    %v1288 = vlaneseq
    %v1289 = vand.u32 %v1288, 127
    %vm1291 = vcmp.lt.s32.totalorder %v1289, 36
    %v1292 = vsel %vm1291, %v1286, %v11
    %s1293 = scalar_lea.vmem [#allocation7], 228
    %v1294 = vpack.c.bf16 0.0, %v1292
    %1296 = vst [vmem:[%s1293] sm:$0xf] %v1294
    %s1297 = scalar_lea.vmem %s3, 232
    %s1299 = sor.u32 255, 127
    %s1300 = sand.u32 %s1299, 85
    %s1301 = sshrl.u32 %s1300, 1
    %s1302 = sor.u32 %s1300, %s1301
    %s1303 = sand.u32 51, %s1302
    %s1304 = sshrl.u32 %s1303, 2
    %s1305 = sor.u32 %s1303, %s1304
    %s1306 = sand.u32 15, %s1305
    %v1307 = vld [vmem:[%s1297] sm:%s1306]
    %v1308 = vunpack.c.l.bf16 %v1307
    %v1309 = vunpack.c.h.bf16 %v1307
    %v1310 = vlaneseq
    %v1311 = vand.u32 %v1310, 127
    %vm1313 = vcmp.lt.s32.totalorder %v1311, 36
    %v1314 = vsel %vm1313, %v1308, %v11
    %s1315 = scalar_lea.vmem [#allocation7], 232
    %v1316 = vpack.c.bf16 0.0, %v1314
    %1318 = vst [vmem:[%s1315] sm:$0xf] %v1316
    %s1319 = scalar_lea.vmem %s3, 236
    %s1321 = sor.u32 255, 127
    %s1322 = sand.u32 %s1321, 85
    %s1323 = sshrl.u32 %s1322, 1
    %s1324 = sor.u32 %s1322, %s1323
    %s1325 = sand.u32 51, %s1324
    %s1326 = sshrl.u32 %s1325, 2
    %s1327 = sor.u32 %s1325, %s1326
    %s1328 = sand.u32 15, %s1327
    %v1329 = vld [vmem:[%s1319] sm:%s1328]
    %v1330 = vunpack.c.l.bf16 %v1329
    %v1331 = vunpack.c.h.bf16 %v1329
    %v1332 = vlaneseq
    %v1333 = vand.u32 %v1332, 127
    %vm1335 = vcmp.lt.s32.totalorder %v1333, 36
    %v1336 = vsel %vm1335, %v1330, %v11
    %s1337 = scalar_lea.vmem [#allocation7], 236
    %v1338 = vpack.c.bf16 0.0, %v1336
    %1340 = vst [vmem:[%s1337] sm:$0xf] %v1338
    %s1341 = scalar_lea.vmem %s3, 240
    %s1343 = sor.u32 255, 127
    %s1344 = sand.u32 %s1343, 85
    %s1345 = sshrl.u32 %s1344, 1
    %s1346 = sor.u32 %s1344, %s1345
    %s1347 = sand.u32 51, %s1346
    %s1348 = sshrl.u32 %s1347, 2
    %s1349 = sor.u32 %s1347, %s1348
    %s1350 = sand.u32 15, %s1349
    %v1351 = vld [vmem:[%s1341] sm:%s1350]
    %v1352 = vunpack.c.l.bf16 %v1351
    %v1353 = vunpack.c.h.bf16 %v1351
    %v1354 = vlaneseq
    %v1355 = vand.u32 %v1354, 127
    %vm1357 = vcmp.lt.s32.totalorder %v1355, 36
    %v1358 = vsel %vm1357, %v1352, %v11
    %s1359 = scalar_lea.vmem [#allocation7], 240
    %v1360 = vpack.c.bf16 0.0, %v1358
    %1362 = vst [vmem:[%s1359] sm:$0xf] %v1360
    %s1363 = scalar_lea.vmem %s3, 244
    %s1365 = sor.u32 255, 127
    %s1366 = sand.u32 %s1365, 85
    %s1367 = sshrl.u32 %s1366, 1
    %s1368 = sor.u32 %s1366, %s1367
    %s1369 = sand.u32 51, %s1368
    %s1370 = sshrl.u32 %s1369, 2
    %s1371 = sor.u32 %s1369, %s1370
    %s1372 = sand.u32 15, %s1371
    %v1373 = vld [vmem:[%s1363] sm:%s1372]
    %v1374 = vunpack.c.l.bf16 %v1373
    %v1375 = vunpack.c.h.bf16 %v1373
    %v1376 = vlaneseq
    %v1377 = vand.u32 %v1376, 127
    %vm1379 = vcmp.lt.s32.totalorder %v1377, 36
    %v1380 = vsel %vm1379, %v1374, %v11
    %s1381 = scalar_lea.vmem [#allocation7], 244
    %v1382 = vpack.c.bf16 0.0, %v1380
    %1384 = vst [vmem:[%s1381] sm:$0xf] %v1382
    %s1385 = scalar_lea.vmem %s3, 248
    %s1387 = sor.u32 255, 127
    %s1388 = sand.u32 %s1387, 85
    %s1389 = sshrl.u32 %s1388, 1
    %s1390 = sor.u32 %s1388, %s1389
    %s1391 = sand.u32 51, %s1390
    %s1392 = sshrl.u32 %s1391, 2
    %s1393 = sor.u32 %s1391, %s1392
    %s1394 = sand.u32 15, %s1393
    %v1395 = vld [vmem:[%s1385] sm:%s1394]
    %v1396 = vunpack.c.l.bf16 %v1395
    %v1397 = vunpack.c.h.bf16 %v1395
    %v1398 = vlaneseq
    %v1399 = vand.u32 %v1398, 127
    %vm1401 = vcmp.lt.s32.totalorder %v1399, 36
    %v1402 = vsel %vm1401, %v1396, %v11
    %s1403 = scalar_lea.vmem [#allocation7], 248
    %v1404 = vpack.c.bf16 0.0, %v1402
    %1406 = vst [vmem:[%s1403] sm:$0xf] %v1404
    %s1407 = scalar_lea.vmem %s3, 252
    %s1409 = sor.u32 255, 127
    %s1410 = sand.u32 %s1409, 85
    %s1411 = sshrl.u32 %s1410, 1
    %s1412 = sor.u32 %s1410, %s1411
    %s1413 = sand.u32 51, %s1412
    %s1414 = sshrl.u32 %s1413, 2
    %s1415 = sor.u32 %s1413, %s1414
    %s1416 = sand.u32 15, %s1415
    %v1417 = vld [vmem:[%s1407] sm:%s1416]
    %v1418 = vunpack.c.l.bf16 %v1417
    %v1419 = vunpack.c.h.bf16 %v1417
    %v1420 = vlaneseq
    %v1421 = vand.u32 %v1420, 127
    %vm1423 = vcmp.lt.s32.totalorder %v1421, 36
    %v1424 = vsel %vm1423, %v1418, %v11
    %s1425 = scalar_lea.vmem [#allocation7], 252
    %v1426 = vpack.c.bf16 0.0, %v1424
    %1428 = vst [vmem:[%s1425] sm:$0xf] %v1426
    %v1430 = vld [vmem:[#allocation7] sm:$0xf]
    %v1431 = vld [vmem:[#allocation7 + $0x4] sm:$0xf]
    %v1432 = vld [vmem:[#allocation7 + $0x8] sm:$0xf]
    %v1433 = vld [vmem:[#allocation7 + $0xc] sm:$0xf]
    %v1434 = vld [vmem:[#allocation7 + $0x10] sm:$0xf]
    %v1435 = vld [vmem:[#allocation7 + $0x14] sm:$0xf]
    %v1436 = vld [vmem:[#allocation7 + $0x18] sm:$0xf]
    %v1437 = vld [vmem:[#allocation7 + $0x1c] sm:$0xf]
    %v1438 = vld [vmem:[#allocation7 + $0x20] sm:$0xf]
    %v1439 = vld [vmem:[#allocation7 + $0x24] sm:$0xf]
    %v1440 = vld [vmem:[#allocation7 + $0x28] sm:$0xf]
    %v1441 = vld [vmem:[#allocation7 + $0x2c] sm:$0xf]
    %v1442 = vld [vmem:[#allocation7 + $0x30] sm:$0xf]
    %v1443 = vld [vmem:[#allocation7 + $0x34] sm:$0xf]
    %v1444 = vld [vmem:[#allocation7 + $0x38] sm:$0xf]
    %v1445 = vld [vmem:[#allocation7 + $0x3c] sm:$0xf]
    %v1446 = vld [vmem:[#allocation7 + $0x40] sm:$0xf]
    %v1447 = vld [vmem:[#allocation7 + $0x44] sm:$0xf]
    %v1448 = vld [vmem:[#allocation7 + $0x48] sm:$0xf]
    %v1449 = vld [vmem:[#allocation7 + $0x4c] sm:$0xf]
    %v1450 = vld [vmem:[#allocation7 + $0x50] sm:$0xf]
    %v1451 = vld [vmem:[#allocation7 + $0x54] sm:$0xf]
    %v1452 = vld [vmem:[#allocation7 + $0x58] sm:$0xf]
    %v1453 = vld [vmem:[#allocation7 + $0x5c] sm:$0xf]
    %v1454 = vld [vmem:[#allocation7 + $0x60] sm:$0xf]
    %v1455 = vld [vmem:[#allocation7 + $0x64] sm:$0xf]
    %v1456 = vld [vmem:[#allocation7 + $0x68] sm:$0xf]
    %v1457 = vld [vmem:[#allocation7 + $0x6c] sm:$0xf]
    %v1458 = vld [vmem:[#allocation7 + $0x70] sm:$0xf]
    %v1459 = vld [vmem:[#allocation7 + $0x74] sm:$0xf]
    %v1460 = vld [vmem:[#allocation7 + $0x78] sm:$0xf]
    %v1461 = vld [vmem:[#allocation7 + $0x7c] sm:$0xf]
    %v1462 = vld [vmem:[#allocation7 + $0x80] sm:$0xf]
    %v1463 = vld [vmem:[#allocation7 + $0x84] sm:$0xf]
    %v1464 = vld [vmem:[#allocation7 + $0x88] sm:$0xf]
    %v1465 = vld [vmem:[#allocation7 + $0x8c] sm:$0xf]
    %v1466 = vld [vmem:[#allocation7 + $0x90] sm:$0xf]
    %v1467 = vld [vmem:[#allocation7 + $0x94] sm:$0xf]
    %v1468 = vld [vmem:[#allocation7 + $0x98] sm:$0xf]
    %v1469 = vld [vmem:[#allocation7 + $0x9c] sm:$0xf]
    %v1470 = vld [vmem:[#allocation7 + $0xa0] sm:$0xf]
    %v1471 = vld [vmem:[#allocation7 + $0xa4] sm:$0xf]
    %v1472 = vld [vmem:[#allocation7 + $0xa8] sm:$0xf]
    %v1473 = vld [vmem:[#allocation7 + $0xac] sm:$0xf]
    %v1474 = vld [vmem:[#allocation7 + $0xb0] sm:$0xf]
    %v1475 = vld [vmem:[#allocation7 + $0xb4] sm:$0xf]
    %v1476 = vld [vmem:[#allocation7 + $0xb8] sm:$0xf]
    %v1477 = vld [vmem:[#allocation7 + $0xbc] sm:$0xf]
    %v1478 = vld [vmem:[#allocation7 + $0xc0] sm:$0xf]
    %v1479 = vld [vmem:[#allocation7 + $0xc4] sm:$0xf]
    %v1480 = vld [vmem:[#allocation7 + $0xc8] sm:$0xf]
    %v1481 = vld [vmem:[#allocation7 + $0xcc] sm:$0xf]
    %v1482 = vld [vmem:[#allocation7 + $0xd0] sm:$0xf]
    %v1483 = vld [vmem:[#allocation7 + $0xd4] sm:$0xf]
    %v1484 = vld [vmem:[#allocation7 + $0xd8] sm:$0xf]
    %v1485 = vld [vmem:[#allocation7 + $0xdc] sm:$0xf]
    %v1486 = vld [vmem:[#allocation7 + $0xe0] sm:$0xf]
    %v1487 = vld [vmem:[#allocation7 + $0xe4] sm:$0xf]
    %v1488 = vld [vmem:[#allocation7 + $0xe8] sm:$0xf]
    %v1489 = vld [vmem:[#allocation7 + $0xec] sm:$0xf]
    %v1490 = vld [vmem:[#allocation7 + $0xf0] sm:$0xf]
    %v1491 = vld [vmem:[#allocation7 + $0xf4] sm:$0xf]
    %v1492 = vld [vmem:[#allocation7 + $0xf8] sm:$0xf]
    %v1493 = vld [vmem:[#allocation7 + $0xfc] sm:$0xf]
    %v1494 = vmax.bf16 %v1430, 0
    %v1495 = vmax.bf16 %v1431, 0
    %v1496 = vmax.bf16 %v1432, 0
    %v1497 = vmax.bf16 %v1433, 0
    %v1498 = vmax.bf16 %v1434, 0
    %v1499 = vmax.bf16 %v1435, 0
    %v1500 = vmax.bf16 %v1436, 0
    %v1501 = vmax.bf16 %v1437, 0
    %v1502 = vmax.bf16 %v1438, 0
    %v1503 = vmax.bf16 %v1439, 0
    %v1504 = vmax.bf16 %v1440, 0
    %v1505 = vmax.bf16 %v1441, 0
    %v1506 = vmax.bf16 %v1442, 0
    %v1507 = vmax.bf16 %v1443, 0
    %v1508 = vmax.bf16 %v1444, 0
    %v1509 = vmax.bf16 %v1445, 0
    %v1510 = vmax.bf16 %v1446, 0
    %v1511 = vmax.bf16 %v1447, 0
    %v1512 = vmax.bf16 %v1448, 0
    %v1513 = vmax.bf16 %v1449, 0
    %v1514 = vmax.bf16 %v1450, 0
    %v1515 = vmax.bf16 %v1451, 0
    %v1516 = vmax.bf16 %v1452, 0
    %v1517 = vmax.bf16 %v1453, 0
    %v1518 = vmax.bf16 %v1454, 0
    %v1519 = vmax.bf16 %v1455, 0
    %v1520 = vmax.bf16 %v1456, 0
    %v1521 = vmax.bf16 %v1457, 0
    %v1522 = vmax.bf16 %v1458, 0
    %v1523 = vmax.bf16 %v1459, 0
    %v1524 = vmax.bf16 %v1460, 0
    %v1525 = vmax.bf16 %v1461, 0
    %v1526 = vmax.bf16 %v1462, 0
    %v1527 = vmax.bf16 %v1463, 0
    %v1528 = vmax.bf16 %v1464, 0
    %v1529 = vmax.bf16 %v1465, 0
    %v1530 = vmax.bf16 %v1466, 0
    %v1531 = vmax.bf16 %v1467, 0
    %v1532 = vmax.bf16 %v1468, 0
    %v1533 = vmax.bf16 %v1469, 0
    %v1534 = vmax.bf16 %v1470, 0
    %v1535 = vmax.bf16 %v1471, 0
    %v1536 = vmax.bf16 %v1472, 0
    %v1537 = vmax.bf16 %v1473, 0
    %v1538 = vmax.bf16 %v1474, 0
    %v1539 = vmax.bf16 %v1475, 0
    %v1540 = vmax.bf16 %v1476, 0
    %v1541 = vmax.bf16 %v1477, 0
    %v1542 = vmax.bf16 %v1478, 0
    %v1543 = vmax.bf16 %v1479, 0
    %v1544 = vmax.bf16 %v1480, 0
    %v1545 = vmax.bf16 %v1481, 0
    %v1546 = vmax.bf16 %v1482, 0
    %v1547 = vmax.bf16 %v1483, 0
    %v1548 = vmax.bf16 %v1484, 0
    %v1549 = vmax.bf16 %v1485, 0
    %v1550 = vmax.bf16 %v1486, 0
    %v1551 = vmax.bf16 %v1487, 0
    %v1552 = vmax.bf16 %v1488, 0
    %v1553 = vmax.bf16 %v1489, 0
    %v1554 = vmax.bf16 %v1490, 0
    %v1555 = vmax.bf16 %v1491, 0
    %v1556 = vmax.bf16 %v1492, 0
    %v1557 = vmax.bf16 %v1493, 0
    %v1558 = vld [vmem:[%s0] sm:$0xf]
    %v1559 = vld [vmem:[%s0 + $0x4] sm:$0xf]
    %v1560 = vld [vmem:[%s0 + $0x8] sm:$0xf]
    %v1561 = vld [vmem:[%s0 + $0xc] sm:$0xf]
    %v1562 = vld [vmem:[%s0 + $0x10] sm:$0xf]
    %v1563 = vld [vmem:[%s0 + $0x14] sm:$0xf]
    %v1628 = vunpack.c.l.b16 %v1494
    %v1629 = vunpack.c.l.b16 %v1495
    %v1630 = vunpack.c.l.b16 %v1496
    %v1631 = vunpack.c.l.b16 %v1497
    %v1632 = vunpack.c.l.b16 %v1498
    %v1633 = vunpack.c.l.b16 %v1499
    %v1634 = vunpack.c.l.b16 %v1500
    %v1635 = vunpack.c.l.b16 %v1501
    %v1636 = vunpack.c.l.b16 %v1502
    %v1637 = vunpack.c.l.b16 %v1503
    %v1638 = vunpack.c.l.b16 %v1504
    %v1639 = vunpack.c.l.b16 %v1505
    %v1640 = vunpack.c.l.b16 %v1506
    %v1641 = vunpack.c.l.b16 %v1507
    %v1642 = vunpack.c.l.b16 %v1508
    %v1643 = vunpack.c.l.b16 %v1509
    %v1644 = vunpack.c.l.b16 %v1510
    %v1645 = vunpack.c.l.b16 %v1511
    %v1646 = vunpack.c.l.b16 %v1512
    %v1647 = vunpack.c.l.b16 %v1513
    %v1648 = vunpack.c.l.b16 %v1514
    %v1649 = vunpack.c.l.b16 %v1515
    %v1650 = vunpack.c.l.b16 %v1516
    %v1651 = vunpack.c.l.b16 %v1517
    %v1652 = vunpack.c.l.b16 %v1518
    %v1653 = vunpack.c.l.b16 %v1519
    %v1654 = vunpack.c.l.b16 %v1520
    %v1655 = vunpack.c.l.b16 %v1521
    %v1656 = vunpack.c.l.b16 %v1522
    %v1657 = vunpack.c.l.b16 %v1523
    %v1658 = vunpack.c.l.b16 %v1524
    %v1659 = vunpack.c.l.b16 %v1525
    %v1660 = vunpack.c.l.b16 %v1526
    %v1661 = vunpack.c.l.b16 %v1527
    %v1662 = vunpack.c.l.b16 %v1528
    %v1663 = vunpack.c.l.b16 %v1529
    %v1664 = vunpack.c.l.b16 %v1530
    %v1665 = vunpack.c.l.b16 %v1531
    %v1666 = vunpack.c.l.b16 %v1532
    %v1667 = vunpack.c.l.b16 %v1533
    %v1668 = vunpack.c.l.b16 %v1534
    %v1669 = vunpack.c.l.b16 %v1535
    %v1670 = vunpack.c.l.b16 %v1536
    %v1671 = vunpack.c.l.b16 %v1537
    %v1672 = vunpack.c.l.b16 %v1538
    %v1673 = vunpack.c.l.b16 %v1539
    %v1674 = vunpack.c.l.b16 %v1540
    %v1675 = vunpack.c.l.b16 %v1541
    %v1676 = vunpack.c.l.b16 %v1542
    %v1677 = vunpack.c.l.b16 %v1543
    %v1678 = vunpack.c.l.b16 %v1544
    %v1679 = vunpack.c.l.b16 %v1545
    %v1680 = vunpack.c.l.b16 %v1546
    %v1681 = vunpack.c.l.b16 %v1547
    %v1682 = vunpack.c.l.b16 %v1548
    %v1683 = vunpack.c.l.b16 %v1549
    %v1684 = vunpack.c.l.b16 %v1550
    %v1685 = vunpack.c.l.b16 %v1551
    %v1686 = vunpack.c.l.b16 %v1552
    %v1687 = vunpack.c.l.b16 %v1553
    %v1688 = vunpack.c.l.b16 %v1554
    %v1689 = vunpack.c.l.b16 %v1555
    %v1690 = vunpack.c.l.b16 %v1556
    %v1691 = vunpack.c.l.b16 %v1557
    %v1692 = vpack.c.b16 %v1629, %v1628
    %v1693 = vpack.c.b16 %v1631, %v1630
    %v1694 = vpack.c.b16 %v1633, %v1632
    %v1695 = vpack.c.b16 %v1635, %v1634
    %v1696 = vpack.c.b16 %v1637, %v1636
    %v1697 = vpack.c.b16 %v1639, %v1638
    %v1698 = vpack.c.b16 %v1641, %v1640
    %v1699 = vpack.c.b16 %v1643, %v1642
    %v1700 = vpack.c.b16 %v1645, %v1644
    %v1701 = vpack.c.b16 %v1647, %v1646
    %v1702 = vpack.c.b16 %v1649, %v1648
    %v1703 = vpack.c.b16 %v1651, %v1650
    %v1704 = vpack.c.b16 %v1653, %v1652
    %v1705 = vpack.c.b16 %v1655, %v1654
    %v1706 = vpack.c.b16 %v1657, %v1656
    %v1707 = vpack.c.b16 %v1659, %v1658
    %v1708 = vpack.c.b16 %v1661, %v1660
    %v1709 = vpack.c.b16 %v1663, %v1662
    %v1710 = vpack.c.b16 %v1665, %v1664
    %v1711 = vpack.c.b16 %v1667, %v1666
    %v1712 = vpack.c.b16 %v1669, %v1668
    %v1713 = vpack.c.b16 %v1671, %v1670
    %v1714 = vpack.c.b16 %v1673, %v1672
    %v1715 = vpack.c.b16 %v1675, %v1674
    %v1716 = vpack.c.b16 %v1677, %v1676
    %v1717 = vpack.c.b16 %v1679, %v1678
    %v1718 = vpack.c.b16 %v1681, %v1680
    %v1719 = vpack.c.b16 %v1683, %v1682
    %v1720 = vpack.c.b16 %v1685, %v1684
    %v1721 = vpack.c.b16 %v1687, %v1686
    %v1722 = vpack.c.b16 %v1689, %v1688
    %v1723 = vpack.c.b16 %v1691, %v1690
    %v1730 = vunpack.c.l.b16 %v1558
    %v1731 = vunpack.c.l.b16 %v1559
    %v1732 = vunpack.c.l.b16 %v1560
    %v1733 = vunpack.c.l.b16 %v1561
    %v1734 = vunpack.c.l.b16 %v1562
    %v1735 = vunpack.c.l.b16 %v1563
    %v1736 = vpack.c.b16 %v1731, %v1730
    %v1737 = vpack.c.b16 %v1733, %v1732
    %v1738 = vpack.c.b16 %v1735, %v1734
    %vm1742 = vcmask 392192
    %v1744 = vsel %vm1742, %v1692, 0
    %v1747 = vsel %vm1742, %v1693, 0
    %v1750 = vsel %vm1742, %v1694, 0
    %v1753 = vsel %vm1742, %v1695, 0
    %v1756 = vsel %vm1742, %v1696, 0
    %v1759 = vsel %vm1742, %v1697, 0
    %v1762 = vsel %vm1742, %v1698, 0
    %v1765 = vsel %vm1742, %v1699, 0
    %v1768 = vsel %vm1742, %v1700, 0
    %v1771 = vsel %vm1742, %v1701, 0
    %v1774 = vsel %vm1742, %v1702, 0
    %v1777 = vsel %vm1742, %v1703, 0
    %v1780 = vsel %vm1742, %v1704, 0
    %v1783 = vsel %vm1742, %v1705, 0
    %v1786 = vsel %vm1742, %v1706, 0
    %v1789 = vsel %vm1742, %v1707, 0
    %v1792 = vsel %vm1742, %v1708, 0
    %v1795 = vsel %vm1742, %v1709, 0
    %v1798 = vsel %vm1742, %v1710, 0
    %v1801 = vsel %vm1742, %v1711, 0
    %v1804 = vsel %vm1742, %v1712, 0
    %v1807 = vsel %vm1742, %v1713, 0
    %v1810 = vsel %vm1742, %v1714, 0
    %v1813 = vsel %vm1742, %v1715, 0
    %v1816 = vsel %vm1742, %v1716, 0
    %v1819 = vsel %vm1742, %v1717, 0
    %v1822 = vsel %vm1742, %v1718, 0
    %v1825 = vsel %vm1742, %v1719, 0
    %v1828 = vsel %vm1742, %v1720, 0
    %v1831 = vsel %vm1742, %v1721, 0
    %v1834 = vsel %vm1742, %v1722, 0
    %v1837 = vsel %vm1742, %v1723, 0
    %1839 = vmatprep.subr.bf16.mxu0 0
    %1840 = vmatpush1.bf16.msra.mxu0 %v1736
    %1841 = vmatprep.subr.bf16.mxu0 0
    %1842 = vmatpush1.bf16.msra.mxu0 %v1737
    %1843 = vmatprep.subr.bf16.mxu0 0
    %1844 = vmatpush1.bf16.msra.mxu0 %v1738
    %1845 = vmatprep.subr.bf16.mxu0 0
    %1846 = vmatpush1.bf16.msra.mxu0 0
    %1847 = vmatprep.subr.bf16.mxu0 0
    %1848 = vmatpush1.bf16.msra.mxu0 0
    %1849 = vmatprep.subr.bf16.mxu0 0
    %1850 = vmatpush1.bf16.msra.mxu0 0
    %1851 = vmatprep.subr.bf16.mxu0 0
    %1852 = vmatpush1.bf16.msra.mxu0 0
    %1853 = vmatprep.subr.bf16.mxu0 0
    %1854 = vmatpush1.bf16.msra.mxu0 0
    %1855 = vmatprep.subr.bf16.mxu0 0
    %1856 = vmatpush1.bf16.msra.mxu0 0
    %1857 = vmatprep.subr.bf16.mxu0 0
    %1858 = vmatpush1.bf16.msra.mxu0 0
    %1859 = vmatprep.subr.bf16.mxu0 0
    %1860 = vmatpush1.bf16.msra.mxu0 0
    %1861 = vmatprep.subr.bf16.mxu0 0
    %1862 = vmatpush1.bf16.msra.mxu0 0
    %1863 = vmatprep.subr.bf16.mxu0 0
    %1864 = vmatpush1.bf16.msra.mxu0 0
    %1865 = vmatprep.subr.bf16.mxu0 0
    %1866 = vmatpush1.bf16.msra.mxu0 0
    %1867 = vmatprep.subr.bf16.mxu0 0
    %1868 = vmatpush1.bf16.msra.mxu0 0
    %1869 = vmatprep.subr.bf16.mxu0 0
    %1870 = vmatpush1.bf16.msra.mxu0 0
    %1871 = vmatprep.mubr.bf16.mxu0 0
    %1872 = vmatmul.mubr.bf16.gmra.mrb[0].mxu0 %v1744
    %v1873 = vpop.f32.mrb[0].mxu0
    %v1874 = vadd.f32 0.0, %v1873
    %v1875 = vpop.f32.mrb[0].mxu0
    %v1876 = vpop.f32.mrb[0].mxu0
    %v1877 = vadd.f32 0.0, %v1876
    %v1878 = vpop.f32.mrb[0].mxu0
    %1879 = vmatprep.mubr.bf16.mxu0 0
    %1880 = vmatmul.mubr.bf16.gmra.mrb[0].mxu0 %v1747
    %v1881 = vpop.f32.mrb[0].mxu0
    %v1882 = vadd.f32 0.0, %v1881
    %v1883 = vpop.f32.mrb[0].mxu0
    %v1884 = vpop.f32.mrb[0].mxu0
    %v1885 = vadd.f32 0.0, %v1884
    %v1886 = vpop.f32.mrb[0].mxu0
    %1887 = vmatprep.mubr.bf16.mxu0 0
    %1888 = vmatmul.mubr.bf16.gmra.mrb[0].mxu0 %v1750
    %v1889 = vpop.f32.mrb[0].mxu0
    %v1890 = vadd.f32 0.0, %v1889
    %v1891 = vpop.f32.mrb[0].mxu0
    %v1892 = vpop.f32.mrb[0].mxu0
    %v1893 = vadd.f32 0.0, %v1892
    %v1894 = vpop.f32.mrb[0].mxu0
    %1895 = vmatprep.mubr.bf16.mxu0 0
    %1896 = vmatmul.mubr.bf16.gmra.mrb[0].mxu0 %v1753
    %v1897 = vpop.f32.mrb[0].mxu0
    %v1898 = vadd.f32 0.0, %v1897
    %v1899 = vpop.f32.mrb[0].mxu0
    %v1900 = vpop.f32.mrb[0].mxu0
    %v1901 = vadd.f32 0.0, %v1900
    %v1902 = vpop.f32.mrb[0].mxu0
    %1903 = vmatprep.mubr.bf16.mxu0 0
    %1904 = vmatmul.mubr.bf16.gmra.mrb[0].mxu0 %v1756
    %v1905 = vpop.f32.mrb[0].mxu0
    %v1906 = vadd.f32 0.0, %v1905
    %v1907 = vpop.f32.mrb[0].mxu0
    %v1908 = vpop.f32.mrb[0].mxu0
    %v1909 = vadd.f32 0.0, %v1908
    %v1910 = vpop.f32.mrb[0].mxu0
    %1911 = vmatprep.mubr.bf16.mxu0 0
    %1912 = vmatmul.mubr.bf16.gmra.mrb[0].mxu0 %v1759
    %v1913 = vpop.f32.mrb[0].mxu0
    %v1914 = vadd.f32 0.0, %v1913
    %v1915 = vpop.f32.mrb[0].mxu0
    %v1916 = vpop.f32.mrb[0].mxu0
    %v1917 = vadd.f32 0.0, %v1916
    %v1918 = vpop.f32.mrb[0].mxu0
    %1919 = vmatprep.mubr.bf16.mxu0 0
    %1920 = vmatmul.mubr.bf16.gmra.mrb[0].mxu0 %v1762
    %v1921 = vpop.f32.mrb[0].mxu0
    %v1922 = vadd.f32 0.0, %v1921
    %v1923 = vpop.f32.mrb[0].mxu0
    %v1924 = vpop.f32.mrb[0].mxu0
    %v1925 = vadd.f32 0.0, %v1924
    %v1926 = vpop.f32.mrb[0].mxu0
    %1927 = vmatprep.mubr.bf16.mxu0 0
    %1928 = vmatmul.mubr.bf16.gmra.mrb[0].mxu0 %v1765
    %v1929 = vpop.f32.mrb[0].mxu0
    %v1930 = vadd.f32 0.0, %v1929
    %v1931 = vpop.f32.mrb[0].mxu0
    %v1932 = vpop.f32.mrb[0].mxu0
    %v1933 = vadd.f32 0.0, %v1932
    %v1934 = vpop.f32.mrb[0].mxu0
    %1935 = vmatprep.mubr.bf16.mxu0 0
    %1936 = vmatmul.mubr.bf16.gmra.mrb[0].mxu0 %v1768
    %v1937 = vpop.f32.mrb[0].mxu0
    %v1938 = vadd.f32 0.0, %v1937
    %v1939 = vpop.f32.mrb[0].mxu0
    %v1940 = vpop.f32.mrb[0].mxu0
    %v1941 = vadd.f32 0.0, %v1940
    %v1942 = vpop.f32.mrb[0].mxu0
    %1943 = vmatprep.mubr.bf16.mxu0 0
    %1944 = vmatmul.mubr.bf16.gmra.mrb[0].mxu0 %v1771
    %v1945 = vpop.f32.mrb[0].mxu0
    %v1946 = vadd.f32 0.0, %v1945
    %v1947 = vpop.f32.mrb[0].mxu0
    %v1948 = vpop.f32.mrb[0].mxu0
    %v1949 = vadd.f32 0.0, %v1948
    %v1950 = vpop.f32.mrb[0].mxu0
    %1951 = vmatprep.mubr.bf16.mxu0 0
    %1952 = vmatmul.mubr.bf16.gmra.mrb[0].mxu0 %v1774
    %v1953 = vpop.f32.mrb[0].mxu0
    %v1954 = vadd.f32 0.0, %v1953
    %v1955 = vpop.f32.mrb[0].mxu0
    %v1956 = vpop.f32.mrb[0].mxu0
    %v1957 = vadd.f32 0.0, %v1956
    %v1958 = vpop.f32.mrb[0].mxu0
    %1959 = vmatprep.mubr.bf16.mxu0 0
    %1960 = vmatmul.mubr.bf16.gmra.mrb[0].mxu0 %v1777
    %v1961 = vpop.f32.mrb[0].mxu0
    %v1962 = vadd.f32 0.0, %v1961
    %v1963 = vpop.f32.mrb[0].mxu0
    %v1964 = vpop.f32.mrb[0].mxu0
    %v1965 = vadd.f32 0.0, %v1964
    %v1966 = vpop.f32.mrb[0].mxu0
    %1967 = vmatprep.mubr.bf16.mxu0 0
    %1968 = vmatmul.mubr.bf16.gmra.mrb[0].mxu0 %v1780
    %v1969 = vpop.f32.mrb[0].mxu0
    %v1970 = vadd.f32 0.0, %v1969
    %v1971 = vpop.f32.mrb[0].mxu0
    %v1972 = vpop.f32.mrb[0].mxu0
    %v1973 = vadd.f32 0.0, %v1972
    %v1974 = vpop.f32.mrb[0].mxu0
    %1975 = vmatprep.mubr.bf16.mxu0 0
    %1976 = vmatmul.mubr.bf16.gmra.mrb[0].mxu0 %v1783
    %v1977 = vpop.f32.mrb[0].mxu0
    %v1978 = vadd.f32 0.0, %v1977
    %v1979 = vpop.f32.mrb[0].mxu0
    %v1980 = vpop.f32.mrb[0].mxu0
    %v1981 = vadd.f32 0.0, %v1980
    %v1982 = vpop.f32.mrb[0].mxu0
    %1983 = vmatprep.mubr.bf16.mxu0 0
    %1984 = vmatmul.mubr.bf16.gmra.mrb[0].mxu0 %v1786
    %v1985 = vpop.f32.mrb[0].mxu0
    %v1986 = vadd.f32 0.0, %v1985
    %v1987 = vpop.f32.mrb[0].mxu0
    %v1988 = vpop.f32.mrb[0].mxu0
    %v1989 = vadd.f32 0.0, %v1988
    %v1990 = vpop.f32.mrb[0].mxu0
    %1991 = vmatprep.mubr.bf16.mxu0 0
    %1992 = vmatmul.mubr.bf16.gmra.mrb[0].mxu0 %v1789
    %v1993 = vpop.f32.mrb[0].mxu0
    %v1994 = vadd.f32 0.0, %v1993
    %v1995 = vpop.f32.mrb[0].mxu0
    %v1996 = vpop.f32.mrb[0].mxu0
    %v1997 = vadd.f32 0.0, %v1996
    %v1998 = vpop.f32.mrb[0].mxu0
    %1999 = vmatprep.mubr.bf16.mxu0 0
    %2000 = vmatmul.mubr.bf16.gmra.mrb[0].mxu0 %v1792
    %v2001 = vpop.f32.mrb[0].mxu0
    %v2002 = vadd.f32 0.0, %v2001
    %v2003 = vpop.f32.mrb[0].mxu0
    %v2004 = vpop.f32.mrb[0].mxu0
    %v2005 = vadd.f32 0.0, %v2004
    %v2006 = vpop.f32.mrb[0].mxu0
    %2007 = vmatprep.mubr.bf16.mxu0 0
    %2008 = vmatmul.mubr.bf16.gmra.mrb[0].mxu0 %v1795
    %v2009 = vpop.f32.mrb[0].mxu0
    %v2010 = vadd.f32 0.0, %v2009
    %v2011 = vpop.f32.mrb[0].mxu0
    %v2012 = vpop.f32.mrb[0].mxu0
    %v2013 = vadd.f32 0.0, %v2012
    %v2014 = vpop.f32.mrb[0].mxu0
    %2015 = vmatprep.mubr.bf16.mxu0 0
    %2016 = vmatmul.mubr.bf16.gmra.mrb[0].mxu0 %v1798
    %v2017 = vpop.f32.mrb[0].mxu0
    %v2018 = vadd.f32 0.0, %v2017
    %v2019 = vpop.f32.mrb[0].mxu0
    %v2020 = vpop.f32.mrb[0].mxu0
    %v2021 = vadd.f32 0.0, %v2020
    %v2022 = vpop.f32.mrb[0].mxu0
    %2023 = vmatprep.mubr.bf16.mxu0 0
    %2024 = vmatmul.mubr.bf16.gmra.mrb[0].mxu0 %v1801
    %v2025 = vpop.f32.mrb[0].mxu0
    %v2026 = vadd.f32 0.0, %v2025
    %v2027 = vpop.f32.mrb[0].mxu0
    %v2028 = vpop.f32.mrb[0].mxu0
    %v2029 = vadd.f32 0.0, %v2028
    %v2030 = vpop.f32.mrb[0].mxu0
    %2031 = vmatprep.mubr.bf16.mxu0 0
    %2032 = vmatmul.mubr.bf16.gmra.mrb[0].mxu0 %v1804
    %v2033 = vpop.f32.mrb[0].mxu0
    %v2034 = vadd.f32 0.0, %v2033
    %v2035 = vpop.f32.mrb[0].mxu0
    %v2036 = vpop.f32.mrb[0].mxu0
    %v2037 = vadd.f32 0.0, %v2036
    %v2038 = vpop.f32.mrb[0].mxu0
    %2039 = vmatprep.mubr.bf16.mxu0 0
    %2040 = vmatmul.mubr.bf16.gmra.mrb[0].mxu0 %v1807
    %v2041 = vpop.f32.mrb[0].mxu0
    %v2042 = vadd.f32 0.0, %v2041
    %v2043 = vpop.f32.mrb[0].mxu0
    %v2044 = vpop.f32.mrb[0].mxu0
    %v2045 = vadd.f32 0.0, %v2044
    %v2046 = vpop.f32.mrb[0].mxu0
    %2047 = vmatprep.mubr.bf16.mxu0 0
    %2048 = vmatmul.mubr.bf16.gmra.mrb[0].mxu0 %v1810
    %v2049 = vpop.f32.mrb[0].mxu0
    %v2050 = vadd.f32 0.0, %v2049
    %v2051 = vpop.f32.mrb[0].mxu0
    %v2052 = vpop.f32.mrb[0].mxu0
    %v2053 = vadd.f32 0.0, %v2052
    %v2054 = vpop.f32.mrb[0].mxu0
    %2055 = vmatprep.mubr.bf16.mxu0 0
    %2056 = vmatmul.mubr.bf16.gmra.mrb[0].mxu0 %v1813
    %v2057 = vpop.f32.mrb[0].mxu0
    %v2058 = vadd.f32 0.0, %v2057
    %v2059 = vpop.f32.mrb[0].mxu0
    %v2060 = vpop.f32.mrb[0].mxu0
    %v2061 = vadd.f32 0.0, %v2060
    %v2062 = vpop.f32.mrb[0].mxu0
    %2063 = vmatprep.mubr.bf16.mxu0 0
    %2064 = vmatmul.mubr.bf16.gmra.mrb[0].mxu0 %v1816
    %v2065 = vpop.f32.mrb[0].mxu0
    %v2066 = vadd.f32 0.0, %v2065
    %v2067 = vpop.f32.mrb[0].mxu0
    %v2068 = vpop.f32.mrb[0].mxu0
    %v2069 = vadd.f32 0.0, %v2068
    %v2070 = vpop.f32.mrb[0].mxu0
    %2071 = vmatprep.mubr.bf16.mxu0 0
    %2072 = vmatmul.mubr.bf16.gmra.mrb[0].mxu0 %v1819
    %v2073 = vpop.f32.mrb[0].mxu0
    %v2074 = vadd.f32 0.0, %v2073
    %v2075 = vpop.f32.mrb[0].mxu0
    %v2076 = vpop.f32.mrb[0].mxu0
    %v2077 = vadd.f32 0.0, %v2076
    %v2078 = vpop.f32.mrb[0].mxu0
    %2079 = vmatprep.mubr.bf16.mxu0 0
    %2080 = vmatmul.mubr.bf16.gmra.mrb[0].mxu0 %v1822
    %v2081 = vpop.f32.mrb[0].mxu0
    %v2082 = vadd.f32 0.0, %v2081
    %v2083 = vpop.f32.mrb[0].mxu0
    %v2084 = vpop.f32.mrb[0].mxu0
    %v2085 = vadd.f32 0.0, %v2084
    %v2086 = vpop.f32.mrb[0].mxu0
    %2087 = vmatprep.mubr.bf16.mxu0 0
    %2088 = vmatmul.mubr.bf16.gmra.mrb[0].mxu0 %v1825
    %v2089 = vpop.f32.mrb[0].mxu0
    %v2090 = vadd.f32 0.0, %v2089
    %v2091 = vpop.f32.mrb[0].mxu0
    %v2092 = vpop.f32.mrb[0].mxu0
    %v2093 = vadd.f32 0.0, %v2092
    %v2094 = vpop.f32.mrb[0].mxu0
    %2095 = vmatprep.mubr.bf16.mxu0 0
    %2096 = vmatmul.mubr.bf16.gmra.mrb[0].mxu0 %v1828
    %v2097 = vpop.f32.mrb[0].mxu0
    %v2098 = vadd.f32 0.0, %v2097
    %v2099 = vpop.f32.mrb[0].mxu0
    %v2100 = vpop.f32.mrb[0].mxu0
    %v2101 = vadd.f32 0.0, %v2100
    %v2102 = vpop.f32.mrb[0].mxu0
    %2103 = vmatprep.mubr.bf16.mxu0 0
    %2104 = vmatmul.mubr.bf16.gmra.mrb[0].mxu0 %v1831
    %v2105 = vpop.f32.mrb[0].mxu0
    %v2106 = vadd.f32 0.0, %v2105
    %v2107 = vpop.f32.mrb[0].mxu0
    %v2108 = vpop.f32.mrb[0].mxu0
    %v2109 = vadd.f32 0.0, %v2108
    %v2110 = vpop.f32.mrb[0].mxu0
    %2111 = vmatprep.mubr.bf16.mxu0 0
    %2112 = vmatmul.mubr.bf16.gmra.mrb[0].mxu0 %v1834
    %v2113 = vpop.f32.mrb[0].mxu0
    %v2114 = vadd.f32 0.0, %v2113
    %v2115 = vpop.f32.mrb[0].mxu0
    %v2116 = vpop.f32.mrb[0].mxu0
    %v2117 = vadd.f32 0.0, %v2116
    %v2118 = vpop.f32.mrb[0].mxu0
    %2119 = vmatprep.mubr.bf16.mxu0 0
    %2120 = vmatmul.mubr.bf16.gmra.mrb[0].mxu0 %v1837
    %v2121 = vpop.f32.mrb[0].mxu0
    %v2122 = vadd.f32 0.0, %v2121
    %v2123 = vpop.f32.mrb[0].mxu0
    %v2124 = vpop.f32.mrb[0].mxu0
    %v2125 = vadd.f32 0.0, %v2124
    %v2126 = vpop.f32.mrb[0].mxu0
    %2127 = vdwg.mxu0
    %v2128 = vld [vmem:[%s1] sm:$0x1]
    %v2130 = vlaneseq
    %v2131 = vshrl.u32 %v2130, 7
    %v2132 = vsub.s32 0, %v2131
    %v2133 = vrot.slane %v2128, %v2132
    %v2135 = vmul.f32 %v1874, %v2133
    %v2136 = vmul.f32 %v1877, %v2133
    %v2137 = vmul.f32 %v1882, %v2133
    %v2138 = vmul.f32 %v1885, %v2133
    %v2139 = vmul.f32 %v1890, %v2133
    %v2140 = vmul.f32 %v1893, %v2133
    %v2141 = vmul.f32 %v1898, %v2133
    %v2142 = vmul.f32 %v1901, %v2133
    %v2143 = vmul.f32 %v1906, %v2133
    %v2144 = vmul.f32 %v1909, %v2133
    %v2145 = vmul.f32 %v1914, %v2133
    %v2146 = vmul.f32 %v1917, %v2133
    %v2147 = vmul.f32 %v1922, %v2133
    %v2148 = vmul.f32 %v1925, %v2133
    %v2149 = vmul.f32 %v1930, %v2133
    %v2150 = vmul.f32 %v1933, %v2133
    %v2151 = vmul.f32 %v1938, %v2133
    %v2152 = vmul.f32 %v1941, %v2133
    %v2153 = vmul.f32 %v1946, %v2133
    %v2154 = vmul.f32 %v1949, %v2133
    %v2155 = vmul.f32 %v1954, %v2133
    %v2156 = vmul.f32 %v1957, %v2133
    %v2157 = vmul.f32 %v1962, %v2133
    %v2158 = vmul.f32 %v1965, %v2133
    %v2159 = vmul.f32 %v1970, %v2133
    %v2160 = vmul.f32 %v1973, %v2133
    %v2161 = vmul.f32 %v1978, %v2133
    %v2162 = vmul.f32 %v1981, %v2133
    %v2163 = vmul.f32 %v1986, %v2133
    %v2164 = vmul.f32 %v1989, %v2133
    %v2165 = vmul.f32 %v1994, %v2133
    %v2166 = vmul.f32 %v1997, %v2133
    %v2167 = vmul.f32 %v2002, %v2133
    %v2168 = vmul.f32 %v2005, %v2133
    %v2169 = vmul.f32 %v2010, %v2133
    %v2170 = vmul.f32 %v2013, %v2133
    %v2171 = vmul.f32 %v2018, %v2133
    %v2172 = vmul.f32 %v2021, %v2133
    %v2173 = vmul.f32 %v2026, %v2133
    %v2174 = vmul.f32 %v2029, %v2133
    %v2175 = vmul.f32 %v2034, %v2133
    %v2176 = vmul.f32 %v2037, %v2133
    %v2177 = vmul.f32 %v2042, %v2133
    %v2178 = vmul.f32 %v2045, %v2133
    %v2179 = vmul.f32 %v2050, %v2133
    %v2180 = vmul.f32 %v2053, %v2133
    %v2181 = vmul.f32 %v2058, %v2133
    %v2182 = vmul.f32 %v2061, %v2133
    %v2183 = vmul.f32 %v2066, %v2133
    %v2184 = vmul.f32 %v2069, %v2133
    %v2185 = vmul.f32 %v2074, %v2133
    %v2186 = vmul.f32 %v2077, %v2133
    %v2187 = vmul.f32 %v2082, %v2133
    %v2188 = vmul.f32 %v2085, %v2133
    %v2189 = vmul.f32 %v2090, %v2133
    %v2190 = vmul.f32 %v2093, %v2133
    %v2191 = vmul.f32 %v2098, %v2133
    %v2192 = vmul.f32 %v2101, %v2133
    %v2193 = vmul.f32 %v2106, %v2133
    %v2194 = vmul.f32 %v2109, %v2133
    %v2195 = vmul.f32 %v2114, %v2133
    %v2196 = vmul.f32 %v2117, %v2133
    %v2197 = vmul.f32 %v2122, %v2133
    %v2198 = vmul.f32 %v2125, %v2133
    %v2199 = vld [vmem:[%s2] sm:$0x1]
    %v2201 = vlaneseq
    %v2202 = vshrl.u32 %v2201, 7
    %v2203 = vsub.s32 0, %v2202
    %v2204 = vrot.slane %v2199, %v2203
    %v2206 = vadd.f32 %v2135, %v2204
    %v2207 = vadd.f32 %v2136, %v2204
    %v2208 = vadd.f32 %v2137, %v2204
    %v2209 = vadd.f32 %v2138, %v2204
    %v2210 = vadd.f32 %v2139, %v2204
    %v2211 = vadd.f32 %v2140, %v2204
    %v2212 = vadd.f32 %v2141, %v2204
    %v2213 = vadd.f32 %v2142, %v2204
    %v2214 = vadd.f32 %v2143, %v2204
    %v2215 = vadd.f32 %v2144, %v2204
    %v2216 = vadd.f32 %v2145, %v2204
    %v2217 = vadd.f32 %v2146, %v2204
    %v2218 = vadd.f32 %v2147, %v2204
    %v2219 = vadd.f32 %v2148, %v2204
    %v2220 = vadd.f32 %v2149, %v2204
    %v2221 = vadd.f32 %v2150, %v2204
    %v2222 = vadd.f32 %v2151, %v2204
    %v2223 = vadd.f32 %v2152, %v2204
    %v2224 = vadd.f32 %v2153, %v2204
    %v2225 = vadd.f32 %v2154, %v2204
    %v2226 = vadd.f32 %v2155, %v2204
    %v2227 = vadd.f32 %v2156, %v2204
    %v2228 = vadd.f32 %v2157, %v2204
    %v2229 = vadd.f32 %v2158, %v2204
    %v2230 = vadd.f32 %v2159, %v2204
    %v2231 = vadd.f32 %v2160, %v2204
    %v2232 = vadd.f32 %v2161, %v2204
    %v2233 = vadd.f32 %v2162, %v2204
    %v2234 = vadd.f32 %v2163, %v2204
    %v2235 = vadd.f32 %v2164, %v2204
    %v2236 = vadd.f32 %v2165, %v2204
    %v2237 = vadd.f32 %v2166, %v2204
    %v2238 = vadd.f32 %v2167, %v2204
    %v2239 = vadd.f32 %v2168, %v2204
    %v2240 = vadd.f32 %v2169, %v2204
    %v2241 = vadd.f32 %v2170, %v2204
    %v2242 = vadd.f32 %v2171, %v2204
    %v2243 = vadd.f32 %v2172, %v2204
    %v2244 = vadd.f32 %v2173, %v2204
    %v2245 = vadd.f32 %v2174, %v2204
    %v2246 = vadd.f32 %v2175, %v2204
    %v2247 = vadd.f32 %v2176, %v2204
    %v2248 = vadd.f32 %v2177, %v2204
    %v2249 = vadd.f32 %v2178, %v2204
    %v2250 = vadd.f32 %v2179, %v2204
    %v2251 = vadd.f32 %v2180, %v2204
    %v2252 = vadd.f32 %v2181, %v2204
    %v2253 = vadd.f32 %v2182, %v2204
    %v2254 = vadd.f32 %v2183, %v2204
    %v2255 = vadd.f32 %v2184, %v2204
    %v2256 = vadd.f32 %v2185, %v2204
    %v2257 = vadd.f32 %v2186, %v2204
    %v2258 = vadd.f32 %v2187, %v2204
    %v2259 = vadd.f32 %v2188, %v2204
    %v2260 = vadd.f32 %v2189, %v2204
    %v2261 = vadd.f32 %v2190, %v2204
    %v2262 = vadd.f32 %v2191, %v2204
    %v2263 = vadd.f32 %v2192, %v2204
    %v2264 = vadd.f32 %v2193, %v2204
    %v2265 = vadd.f32 %v2194, %v2204
    %v2266 = vadd.f32 %v2195, %v2204
    %v2267 = vadd.f32 %v2196, %v2204
    %v2268 = vadd.f32 %v2197, %v2204
    %v2269 = vadd.f32 %v2198, %v2204
    %2270 = vst [vmem:[%s5] sm:$0xff] %v2206
    %2271 = vst [vmem:[%s5 + $0x8] sm:$0xff] %v2207
    %2272 = vst [vmem:[%s5 + $0x10] sm:$0xff] %v2208
    %2273 = vst [vmem:[%s5 + $0x18] sm:$0xff] %v2209
    %2274 = vst [vmem:[%s5 + $0x20] sm:$0xff] %v2210
    %2275 = vst [vmem:[%s5 + $0x28] sm:$0xff] %v2211
    %2276 = vst [vmem:[%s5 + $0x30] sm:$0xff] %v2212
    %2277 = vst [vmem:[%s5 + $0x38] sm:$0xff] %v2213
    %2278 = vst [vmem:[%s5 + $0x40] sm:$0xff] %v2214
    %2279 = vst [vmem:[%s5 + $0x48] sm:$0xff] %v2215
    %2280 = vst [vmem:[%s5 + $0x50] sm:$0xff] %v2216
    %2281 = vst [vmem:[%s5 + $0x58] sm:$0xff] %v2217
    %2282 = vst [vmem:[%s5 + $0x60] sm:$0xff] %v2218
    %2283 = vst [vmem:[%s5 + $0x68] sm:$0xff] %v2219
    %2284 = vst [vmem:[%s5 + $0x70] sm:$0xff] %v2220
    %2285 = vst [vmem:[%s5 + $0x78] sm:$0xff] %v2221
    %2286 = vst [vmem:[%s5 + $0x80] sm:$0xff] %v2222
    %2287 = vst [vmem:[%s5 + $0x88] sm:$0xff] %v2223
    %2288 = vst [vmem:[%s5 + $0x90] sm:$0xff] %v2224
    %2289 = vst [vmem:[%s5 + $0x98] sm:$0xff] %v2225
    %2290 = vst [vmem:[%s5 + $0xa0] sm:$0xff] %v2226
    %2291 = vst [vmem:[%s5 + $0xa8] sm:$0xff] %v2227
    %2292 = vst [vmem:[%s5 + $0xb0] sm:$0xff] %v2228
    %2293 = vst [vmem:[%s5 + $0xb8] sm:$0xff] %v2229
    %2294 = vst [vmem:[%s5 + $0xc0] sm:$0xff] %v2230
    %2295 = vst [vmem:[%s5 + $0xc8] sm:$0xff] %v2231
    %2296 = vst [vmem:[%s5 + $0xd0] sm:$0xff] %v2232
    %2297 = vst [vmem:[%s5 + $0xd8] sm:$0xff] %v2233
    %2298 = vst [vmem:[%s5 + $0xe0] sm:$0xff] %v2234
    %2299 = vst [vmem:[%s5 + $0xe8] sm:$0xff] %v2235
    %2300 = vst [vmem:[%s5 + $0xf0] sm:$0xff] %v2236
    %2301 = vst [vmem:[%s5 + $0xf8] sm:$0xff] %v2237
    %2302 = vst [vmem:[%s5 + $0x100] sm:$0xff] %v2238
    %2303 = vst [vmem:[%s5 + $0x108] sm:$0xff] %v2239
    %2304 = vst [vmem:[%s5 + $0x110] sm:$0xff] %v2240
    %2305 = vst [vmem:[%s5 + $0x118] sm:$0xff] %v2241
    %2306 = vst [vmem:[%s5 + $0x120] sm:$0xff] %v2242
    %2307 = vst [vmem:[%s5 + $0x128] sm:$0xff] %v2243
    %2308 = vst [vmem:[%s5 + $0x130] sm:$0xff] %v2244
    %2309 = vst [vmem:[%s5 + $0x138] sm:$0xff] %v2245
    %2310 = vst [vmem:[%s5 + $0x140] sm:$0xff] %v2246
    %2311 = vst [vmem:[%s5 + $0x148] sm:$0xff] %v2247
    %2312 = vst [vmem:[%s5 + $0x150] sm:$0xff] %v2248
    %2313 = vst [vmem:[%s5 + $0x158] sm:$0xff] %v2249
    %2314 = vst [vmem:[%s5 + $0x160] sm:$0xff] %v2250
    %2315 = vst [vmem:[%s5 + $0x168] sm:$0xff] %v2251
    %2316 = vst [vmem:[%s5 + $0x170] sm:$0xff] %v2252
    %2317 = vst [vmem:[%s5 + $0x178] sm:$0xff] %v2253
    %2318 = vst [vmem:[%s5 + $0x180] sm:$0xff] %v2254
    %2319 = vst [vmem:[%s5 + $0x188] sm:$0xff] %v2255
    %2320 = vst [vmem:[%s5 + $0x190] sm:$0xff] %v2256
    %2321 = vst [vmem:[%s5 + $0x198] sm:$0xff] %v2257
    %2322 = vst [vmem:[%s5 + $0x1a0] sm:$0xff] %v2258
    %2323 = vst [vmem:[%s5 + $0x1a8] sm:$0xff] %v2259
    %2324 = vst [vmem:[%s5 + $0x1b0] sm:$0xff] %v2260
    %2325 = vst [vmem:[%s5 + $0x1b8] sm:$0xff] %v2261
    %2326 = vst [vmem:[%s5 + $0x1c0] sm:$0xff] %v2262
    %2327 = vst [vmem:[%s5 + $0x1c8] sm:$0xff] %v2263
    %2328 = vst [vmem:[%s5 + $0x1d0] sm:$0xff] %v2264
    %2329 = vst [vmem:[%s5 + $0x1d8] sm:$0xff] %v2265
    %2330 = vst [vmem:[%s5 + $0x1e0] sm:$0xff] %v2266
    %2331 = vst [vmem:[%s5 + $0x1e8] sm:$0xff] %v2267
    %2332 = vst [vmem:[%s5 + $0x1f0] sm:$0xff] %v2268
    %2333 = vst [vmem:[%s5 + $0x1f8] sm:$0xff] %v2269
    // Predicated region
    $region18: #{relu_conv_bn_forward.2} parent=1 // pred_check
      _
    $region19: #{relu_conv_bn_forward.2} parent=1 // pred_check_branch
      %2335 = sbr.rel (0) target = $region21
    $region20: #{relu_conv_bn_forward.2} parent=1 // pred_region
      _
    $region21: #{relu_conv_bn_forward.2} parent=1 // pred_fallthru
      _
    // Predicated region
    $region22: #{relu_conv_bn_forward.2} parent=1 // pred_check
      _
    $region23: #{relu_conv_bn_forward.2} parent=1 // pred_check_branch
      %2337 = sbr.rel (0) target = $region25
    $region24: #{relu_conv_bn_forward.2} parent=1 // pred_region
      _
    $region25: #{relu_conv_bn_forward.2} parent=1 // pred_fallthru
      _

</llo_original>
